<compile_context>
chip_gen: v7x
topology: tpu7x:2x2x1
jax: 0.10.0
libtpu: 0.0.40
codegen_flags: <defaults>
</compile_context>

<pallas_src>
import jax
import jax.numpy as jnp
from jax.experimental import pallas as pl
from jax.experimental.pallas import tpu as pltpu

KH = KW = 3  # 3x3 conv taps


# ----------------------------- kernel -------------------------------------- #

def _pick_spatial_chunk(hw, b, target_rows=512):
    """Smallest divisor of hw whose GEMM row-count b*chunk >= target_rows."""
    for c in range(1, hw + 1):
        if hw % c == 0 and b * c >= target_rows:
            return c
    return hw


def _make_fused_kernel(hw):
    inv_hw = 1.0 / float(hw)

    def kernel(p_ref, cw_ref, cb_ref, w1_ref, b1_ref, g_ref, be_ref,
               w2_ref, b2_ref, o_ref, pool_acc):
        # p_ref : (B, chunk, Kp) bf16 im2col tile      cw_ref: (Kp, D) bf16
        # cb/b1/g/be : (1, D) f32    w1: (D, D) bf16   w2: (D, F) bf16
        # b2 : (1, F) f32            o_ref: (B, F) f32 pool_acc: (B, D) f32
        step = pl.program_id(0)
        last = pl.num_programs(0) - 1

        @pl.when(step == 0)
        def _():
            pool_acc[...] = jnp.zeros_like(pool_acc)

        B, chunk, Kp = p_ref.shape
        D = cw_ref.shape[-1]

        # Single lane-dense GEMM (K = Kp, multiple of 128), f32 accumulate.
        patches = p_ref[...].reshape(B * chunk, Kp)
        h = jnp.dot(patches, cw_ref[...], preferred_element_type=jnp.float32)
        h = jnp.maximum(h + cb_ref[...], 0.0)                     # bias + ReLU
        # incremental global-average-pool accumulation
        pool_acc[...] += jnp.sum(h.reshape(B, chunk, D), axis=1)

        @pl.when(step == last)
        def _():
            feats = pool_acc[...] * inv_hw                        # (B, D) f32
            # Linear(D, D)
            h1 = jnp.dot(feats.astype(w1_ref.dtype), w1_ref[...],
                         preferred_element_type=jnp.float32) + b1_ref[...]
            # BatchNorm1d: train-mode batch stats, biased variance, eps=1e-5
            mu = jnp.mean(h1, axis=0, keepdims=True)
            var = jnp.mean((h1 - mu) ** 2, axis=0, keepdims=True)
            hn = (h1 - mu) * jax.lax.rsqrt(var + 1e-5) * g_ref[...] + be_ref[...]
            hn = jnp.maximum(hn, 0.0)                             # ReLU
            # Linear(D, F)
            z = jnp.dot(hn.astype(w2_ref.dtype), w2_ref[...],
                        preferred_element_type=jnp.float32) + b2_ref[...]
            # F.normalize(dim=1): z / max(||z||, 1e-12)  via rsqrt on the EUP
            ssq = jnp.sum(z * z, axis=1, keepdims=True)
            o_ref[...] = z * jax.lax.rsqrt(jnp.maximum(ssq, 1e-24))

    return kernel


# ----------------------------- wrapper -------------------------------------- #

def galaxy_model(x_nchw, params):
    """x_nchw: (B, Cin, H, W) f32 -> L2-normalized (B, F) f32."""
    B, Cin, H, W = x_nchw.shape
    conv_w = params["conv_w"]                       # (KH*KW, Cin, D)
    D = conv_w.shape[-1]
    F = params["w2"].shape[-1]
    HW = H * W
    K0 = KH * KW * Cin
    Kp = ((K0 + 127) // 128) * 128                  # lane-dense contraction dim

    # ---- wrapper-side im2col (lane-dense last dim = Kp) --------------------
    x = jnp.transpose(x_nchw, (0, 2, 3, 1))                     # -> NHWC
    xpad = jnp.pad(x, ((0, 0), (1, 1), (1, 1), (0, 0)))         # "same" pad
    taps = [xpad[:, dy:dy + H, dx:dx + W, :]
            for dy in range(KH) for dx in range(KW)]
    patches = jnp.concatenate(taps, axis=-1).reshape(B, HW, K0)
    patches = jnp.pad(patches, ((0, 0), (0, 0), (0, Kp - K0)))
    patches = patches.astype(jnp.bfloat16)

    cw = jnp.pad(conv_w.reshape(K0, D),
                 ((0, Kp - K0), (0, 0))).astype(jnp.bfloat16)
    w1 = params["w1"].astype(jnp.bfloat16)
    w2 = params["w2"].astype(jnp.bfloat16)

    chunk = _pick_spatial_chunk(HW, B)
    n_steps = HW // chunk

    def full(shape):
        return pl.BlockSpec(shape, lambda s: (0,) * len(shape))

    return pl.pallas_call(
        _make_fused_kernel(HW),
        out_shape=jax.ShapeDtypeStruct((B, F), jnp.float32),
        grid=(n_steps,),
        in_specs=[
            pl.BlockSpec((B, chunk, Kp), lambda s: (0, s, 0)),   # im2col tiles
            full((Kp, D)),                                       # conv weight
            full((1, D)),                                        # conv bias
            full((D, D)), full((1, D)),                          # w1, b1
            full((1, D)), full((1, D)),                          # gamma, beta
            full((D, F)), full((1, F)),                          # w2, b2
        ],
        out_specs=full((B, F)),
        scratch_shapes=[pltpu.VMEM((B, D), jnp.float32)],        # pooled acc
        compiler_params=pltpu.CompilerParams(
            dimension_semantics=("arbitrary",)),   # spatial-chunk reduction
    )(patches, cw, params["conv_b"], w1, params["b1"],
      params["gamma"], params["beta"], w2, params["b2"])


# ----------------------------- main ----------------------------------------- #

if __name__ == "__main__":
    B, C_IN, H, W = 8, 4, 16, 16
    BACKBONE_DIM, FEATURES_DIM = 128, 128

    key = jax.random.PRNGKey(0)
    kx, kcw, kw1, kb1, kw2, kb2 = jax.random.split(key, 6)

    x = jax.random.normal(kx, (B, C_IN, H, W), jnp.float32)

    params = {
        # conv weight stored as (KH*KW, C_in, D)
        "conv_w": 0.1 * jax.random.normal(kcw, (KH * KW, C_IN, BACKBONE_DIM),
                                          jnp.float32),
        "conv_b": jnp.zeros((1, BACKBONE_DIM), jnp.float32),
        # contrastive head: Linear(D,D) -> BN1d(D) -> ReLU -> Linear(D,F)
        "w1": 0.05 * jax.random.normal(kw1, (BACKBONE_DIM, BACKBONE_DIM),
                                       jnp.float32),
        "b1": 0.01 * jax.random.normal(kb1, (1, BACKBONE_DIM), jnp.float32),
        "gamma": jnp.ones((1, BACKBONE_DIM), jnp.float32),
        "beta": jnp.zeros((1, BACKBONE_DIM), jnp.float32),
        "w2": 0.05 * jax.random.normal(kw2, (BACKBONE_DIM, FEATURES_DIM),
                                       jnp.float32),
        "b2": 0.01 * jax.random.normal(kb2, (1, FEATURES_DIM), jnp.float32),
    }

    out = jax.jit(galaxy_model)(x, params)
    out = jax.block_until_ready(out)

    assert out.shape == (B, FEATURES_DIM)
    assert bool(jnp.all(jnp.isfinite(out)))
    # rows are L2-normalized
    assert bool(jnp.allclose(jnp.linalg.norm(out, axis=1), 1.0, atol=1e-3))
    print("KERNEL_OK")
</pallas_src>

<mosaic_0001>
module attributes {stable_mosaic.version = 11 : i64} {
  func.func @kernel(%arg0: i32, %arg1: memref<8x64x128xbf16, #tpu.memory_space<vmem>>, %arg2: memref<128x128xbf16, #tpu.memory_space<vmem>>, %arg3: memref<1x128xf32, #tpu.memory_space<vmem>>, %arg4: memref<128x128xbf16, #tpu.memory_space<vmem>>, %arg5: memref<1x128xf32, #tpu.memory_space<vmem>>, %arg6: memref<1x128xf32, #tpu.memory_space<vmem>>, %arg7: memref<1x128xf32, #tpu.memory_space<vmem>>, %arg8: memref<128x128xbf16, #tpu.memory_space<vmem>>, %arg9: memref<1x128xf32, #tpu.memory_space<vmem>>, %arg10: memref<8x128xf32, #tpu.memory_space<vmem>>, %arg11: memref<8x128xf32, #tpu.memory_space<vmem>>) attributes {dimension_semantics = [#tpu.dimension_semantics<arbitrary>], iteration_bounds = array<i64: 4>, scalar_prefetch = 0 : i64, scratch_operands = 1 : i64, tpu.core_type = #tpu.core_type<tc>, window_params = [{transform_indices = @transform_0, window_bounds = array<i64: 8, 64, 128>}, {pipeline_mode = #tpu.pipeline_mode<synchronous>, transform_indices = @transform_1, window_bounds = array<i64: 128, 128>}, {pipeline_mode = #tpu.pipeline_mode<synchronous>, transform_indices = @transform_2, window_bounds = array<i64: 1, 128>}, {pipeline_mode = #tpu.pipeline_mode<synchronous>, transform_indices = @transform_3, window_bounds = array<i64: 128, 128>}, {pipeline_mode = #tpu.pipeline_mode<synchronous>, transform_indices = @transform_4, window_bounds = array<i64: 1, 128>}, {pipeline_mode = #tpu.pipeline_mode<synchronous>, transform_indices = @transform_5, window_bounds = array<i64: 1, 128>}, {pipeline_mode = #tpu.pipeline_mode<synchronous>, transform_indices = @transform_6, window_bounds = array<i64: 1, 128>}, {pipeline_mode = #tpu.pipeline_mode<synchronous>, transform_indices = @transform_7, window_bounds = array<i64: 128, 128>}, {pipeline_mode = #tpu.pipeline_mode<synchronous>, transform_indices = @transform_8, window_bounds = array<i64: 1, 128>}, {pipeline_mode = #tpu.pipeline_mode<synchronous>, transform_indices = @transform_9, window_bounds = array<i64: 8, 128>}]} {
    %c0_i32 = arith.constant 0 : i32
    %0 = arith.cmpi eq, %arg0, %c0_i32 : i32
    %1 = arith.extui %0 : i1 to i32
    %c0_i32_0 = arith.constant 0 : i32
    %2 = arith.cmpi ne, %1, %c0_i32_0 : i32
    scf.if %2 {
      %cst_14 = arith.constant 0.000000e+00 : f32
      %20 = vector.broadcast %cst_14 : f32 to vector<8x128xf32>
      %c0_15 = arith.constant 0 : index
      %c0_16 = arith.constant 0 : index
      %21 = vector.load %arg11[%c0_15, %c0_16] : memref<8x128xf32, #tpu.memory_space<vmem>>, vector<8x128xf32>
      tpu.vector_store %arg11[%c0_15, %c0_16], %20 {strides = array<i32>} : memref<8x128xf32, #tpu.memory_space<vmem>>, vector<8x128xf32>,
    } else {
    }
    %c0 = arith.constant 0 : index
    %c0_1 = arith.constant 0 : index
    %c0_2 = arith.constant 0 : index
    %3 = vector.load %arg1[%c0, %c0_1, %c0_2] : memref<8x64x128xbf16, #tpu.memory_space<vmem>>, vector<8x64x128xbf16>
    %4 = vector.shape_cast %3 : vector<8x64x128xbf16> to vector<512x128xbf16>
    %c0_3 = arith.constant 0 : index
    %c0_4 = arith.constant 0 : index
    %5 = vector.load %arg2[%c0_3, %c0_4] : memref<128x128xbf16, #tpu.memory_space<vmem>>, vector<128x128xbf16>
    %cst = arith.constant dense<0.000000e+00> : vector<512x128xf32>
    %6 = tpu.matmul %4, %5, %cst {dimension_numbers = #tpu.dot_dimension_numbers<[1], [0], [0], [1], [0, 0, 1, 1], [], []>} : vector<512x128xbf16>, vector<128x128xbf16>, vector<512x128xf32> -> vector<512x128xf32>
    %c0_5 = arith.constant 0 : index
    %c0_6 = arith.constant 0 : index
    %7 = vector.load %arg3[%c0_5, %c0_6] : memref<1x128xf32, #tpu.memory_space<vmem>>, vector<1x128xf32>
    %8 = vector.broadcast %7 : vector<1x128xf32> to vector<512x128xf32>
    %9 = arith.addf %6, %8 : vector<512x128xf32>
    %cst_7 = arith.constant 0.000000e+00 : f32
    %10 = vector.broadcast %cst_7 : f32 to vector<512x128xf32>
    %11 = arith.maximumf %9, %10 : vector<512x128xf32>
    %c0_8 = arith.constant 0 : index
    %c0_9 = arith.constant 0 : index
    %12 = vector.load %arg11[%c0_8, %c0_9] : memref<8x128xf32, #tpu.memory_space<vmem>>, vector<8x128xf32>
    %13 = vector.shape_cast %11 : vector<512x128xf32> to vector<8x64x128xf32>
    %cst_10 = arith.constant dense<0.000000e+00> : vector<8x128xf32>
    %14 = vector.multi_reduction <add>, %13, %cst_10 [1] : vector<8x64x128xf32> to vector<8x128xf32>
    %15 = arith.addf %12, %14 : vector<8x128xf32>
    %c0_11 = arith.constant 0 : index
    %c0_12 = arith.constant 0 : index
    %16 = vector.load %arg11[%c0_11, %c0_12] : memref<8x128xf32, #tpu.memory_space<vmem>>, vector<8x128xf32>
    tpu.vector_store %arg11[%c0_11, %c0_12], %15 {strides = array<i32>} : memref<8x128xf32, #tpu.memory_space<vmem>>, vector<8x128xf32>,
    %c3_i32 = arith.constant 3 : i32
    %17 = arith.cmpi eq, %arg0, %c3_i32 : i32
    %18 = arith.extui %17 : i1 to i32
    %c0_i32_13 = arith.constant 0 : i32
    %19 = arith.cmpi ne, %18, %c0_i32_13 : i32
    scf.if %19 {
      %c0_14 = arith.constant 0 : index
      %c0_15 = arith.constant 0 : index
      %20 = vector.load %arg11[%c0_14, %c0_15] : memref<8x128xf32, #tpu.memory_space<vmem>>, vector<8x128xf32>
      %cst_16 = arith.constant 3.906250e-03 : f32
      %21 = vector.broadcast %cst_16 : f32 to vector<8x128xf32>
      %22 = arith.mulf %20, %21 : vector<8x128xf32>
      %23 = arith.truncf %22 : vector<8x128xf32> to vector<8x128xbf16>
      %c0_17 = arith.constant 0 : index
      %c0_18 = arith.constant 0 : index
      %24 = vector.load %arg4[%c0_17, %c0_18] : memref<128x128xbf16, #tpu.memory_space<vmem>>, vector<128x128xbf16>
      %cst_19 = arith.constant dense<0.000000e+00> : vector<8x128xf32>
      %25 = tpu.matmul %23, %24, %cst_19 {dimension_numbers = #tpu.dot_dimension_numbers<[1], [0], [0], [1], [0, 0, 1, 1], [], []>} : vector<8x128xbf16>, vector<128x128xbf16>, vector<8x128xf32> -> vector<8x128xf32>
      %c0_20 = arith.constant 0 : index
      %c0_21 = arith.constant 0 : index
      %26 = vector.load %arg5[%c0_20, %c0_21] : memref<1x128xf32, #tpu.memory_space<vmem>>, vector<1x128xf32>
      %27 = vector.broadcast %26 : vector<1x128xf32> to vector<8x128xf32>
      %28 = arith.addf %25, %27 : vector<8x128xf32>
      %cst_22 = arith.constant dense<0.000000e+00> : vector<128xf32>
      %29 = vector.multi_reduction <add>, %28, %cst_22 [0] : vector<8x128xf32> to vector<128xf32>
      %30 = vector.shape_cast %29 : vector<128xf32> to vector<1x128xf32>
      %cst_23 = arith.constant 8.000000e+00 : f32
      %31 = vector.broadcast %cst_23 : f32 to vector<1x128xf32>
      %32 = arith.divf %30, %31 : vector<1x128xf32>
      %33 = vector.broadcast %32 : vector<1x128xf32> to vector<8x128xf32>
      %34 = arith.subf %28, %33 : vector<8x128xf32>
      %35 = arith.mulf %34, %34 : vector<8x128xf32>
      %cst_24 = arith.constant dense<0.000000e+00> : vector<128xf32>
      %36 = vector.multi_reduction <add>, %35, %cst_24 [0] : vector<8x128xf32> to vector<128xf32>
      %37 = vector.shape_cast %36 : vector<128xf32> to vector<1x128xf32>
      %cst_25 = arith.constant 8.000000e+00 : f32
      %38 = vector.broadcast %cst_25 : f32 to vector<1x128xf32>
      %39 = arith.divf %37, %38 : vector<1x128xf32>
      %40 = vector.broadcast %32 : vector<1x128xf32> to vector<8x128xf32>
      %41 = arith.subf %28, %40 : vector<8x128xf32>
      %cst_26 = arith.constant 9.99999974E-6 : f32
      %42 = vector.broadcast %cst_26 : f32 to vector<1x128xf32>
      %43 = arith.addf %39, %42 : vector<1x128xf32>
      %44 = math.rsqrt %43 : vector<1x128xf32>
      %45 = vector.broadcast %44 : vector<1x128xf32> to vector<8x128xf32>
      %46 = arith.mulf %41, %45 : vector<8x128xf32>
      %c0_27 = arith.constant 0 : index
      %c0_28 = arith.constant 0 : index
      %47 = vector.load %arg6[%c0_27, %c0_28] : memref<1x128xf32, #tpu.memory_space<vmem>>, vector<1x128xf32>
      %48 = vector.broadcast %47 : vector<1x128xf32> to vector<8x128xf32>
      %49 = arith.mulf %46, %48 : vector<8x128xf32>
      %c0_29 = arith.constant 0 : index
      %c0_30 = arith.constant 0 : index
      %50 = vector.load %arg7[%c0_29, %c0_30] : memref<1x128xf32, #tpu.memory_space<vmem>>, vector<1x128xf32>
      %51 = vector.broadcast %50 : vector<1x128xf32> to vector<8x128xf32>
      %52 = arith.addf %49, %51 : vector<8x128xf32>
      %cst_31 = arith.constant 0.000000e+00 : f32
      %53 = vector.broadcast %cst_31 : f32 to vector<8x128xf32>
      %54 = arith.maximumf %52, %53 : vector<8x128xf32>
      %55 = arith.truncf %54 : vector<8x128xf32> to vector<8x128xbf16>
      %c0_32 = arith.constant 0 : index
      %c0_33 = arith.constant 0 : index
      %56 = vector.load %arg8[%c0_32, %c0_33] : memref<128x128xbf16, #tpu.memory_space<vmem>>, vector<128x128xbf16>
      %cst_34 = arith.constant dense<0.000000e+00> : vector<8x128xf32>
      %57 = tpu.matmul %55, %56, %cst_34 {dimension_numbers = #tpu.dot_dimension_numbers<[1], [0], [0], [1], [0, 0, 1, 1], [], []>} : vector<8x128xbf16>, vector<128x128xbf16>, vector<8x128xf32> -> vector<8x128xf32>
      %c0_35 = arith.constant 0 : index
      %c0_36 = arith.constant 0 : index
      %58 = vector.load %arg9[%c0_35, %c0_36] : memref<1x128xf32, #tpu.memory_space<vmem>>, vector<1x128xf32>
      %59 = vector.broadcast %58 : vector<1x128xf32> to vector<8x128xf32>
      %60 = arith.addf %57, %59 : vector<8x128xf32>
      %61 = arith.mulf %60, %60 : vector<8x128xf32>
      %cst_37 = arith.constant dense<0.000000e+00> : vector<8xf32>
      %62 = vector.multi_reduction <add>, %61, %cst_37 [1] : vector<8x128xf32> to vector<8xf32>
      %63 = vector.shape_cast %62 : vector<8xf32> to vector<8x1xf32>
      %cst_38 = arith.constant 1.000000e-24 : f32
      %64 = vector.broadcast %cst_38 : f32 to vector<8x1xf32>
      %65 = arith.maximumf %63, %64 : vector<8x1xf32>
      %66 = math.rsqrt %65 : vector<8x1xf32>
      %67 = vector.broadcast %66 : vector<8x1xf32> to vector<8x128xf32>
      %68 = arith.mulf %60, %67 : vector<8x128xf32>
      %c0_39 = arith.constant 0 : index
      %c0_40 = arith.constant 0 : index
      %69 = vector.load %arg10[%c0_39, %c0_40] : memref<8x128xf32, #tpu.memory_space<vmem>>, vector<8x128xf32>
      tpu.vector_store %arg10[%c0_39, %c0_40], %68 {strides = array<i32>} : memref<8x128xf32, #tpu.memory_space<vmem>>, vector<8x128xf32>,
    } else {
    }
    return
  }
  func.func @transform_0(%arg0: i32) -> (i32, i32, i32) {
    %c0_i32 = arith.constant 0 : i32
    %c0_i32_0 = arith.constant 0 : i32
    %c0_i32_1 = arith.constant 0 : i32
    return %c0_i32, %arg0, %c0_i32_0 : i32, i32, i32
  }
  func.func @transform_1(%arg0: i32) -> (i32, i32) {
    %c0_i32 = arith.constant 0 : i32
    %c0_i32_0 = arith.constant 0 : i32
    %c0_i32_1 = arith.constant 0 : i32
    return %c0_i32, %c0_i32_0 : i32, i32
  }
  func.func @transform_2(%arg0: i32) -> (i32, i32) {
    %c0_i32 = arith.constant 0 : i32
    %c0_i32_0 = arith.constant 0 : i32
    %c0_i32_1 = arith.constant 0 : i32
    return %c0_i32, %c0_i32_0 : i32, i32
  }
  func.func @transform_3(%arg0: i32) -> (i32, i32) {
    %c0_i32 = arith.constant 0 : i32
    %c0_i32_0 = arith.constant 0 : i32
    %c0_i32_1 = arith.constant 0 : i32
    return %c0_i32, %c0_i32_0 : i32, i32
  }
  func.func @transform_4(%arg0: i32) -> (i32, i32) {
    %c0_i32 = arith.constant 0 : i32
    %c0_i32_0 = arith.constant 0 : i32
    %c0_i32_1 = arith.constant 0 : i32
    return %c0_i32, %c0_i32_0 : i32, i32
  }
  func.func @transform_5(%arg0: i32) -> (i32, i32) {
    %c0_i32 = arith.constant 0 : i32
    %c0_i32_0 = arith.constant 0 : i32
    %c0_i32_1 = arith.constant 0 : i32
    return %c0_i32, %c0_i32_0 : i32, i32
  }
  func.func @transform_6(%arg0: i32) -> (i32, i32) {
    %c0_i32 = arith.constant 0 : i32
    %c0_i32_0 = arith.constant 0 : i32
    %c0_i32_1 = arith.constant 0 : i32
    return %c0_i32, %c0_i32_0 : i32, i32
  }
  func.func @transform_7(%arg0: i32) -> (i32, i32) {
    %c0_i32 = arith.constant 0 : i32
    %c0_i32_0 = arith.constant 0 : i32
    %c0_i32_1 = arith.constant 0 : i32
    return %c0_i32, %c0_i32_0 : i32, i32
  }
  func.func @transform_8(%arg0: i32) -> (i32, i32) {
    %c0_i32 = arith.constant 0 : i32
    %c0_i32_0 = arith.constant 0 : i32
    %c0_i32_1 = arith.constant 0 : i32
    return %c0_i32, %c0_i32_0 : i32, i32
  }
  func.func @transform_9(%arg0: i32) -> (i32, i32) {
    %c0_i32 = arith.constant 0 : i32
    %c0_i32_0 = arith.constant 0 : i32
    %c0_i32_1 = arith.constant 0 : i32
    return %c0_i32, %c0_i32_0 : i32, i32
  }
}

</mosaic_0001>

<llo_original>
// kernel: galaxy_model.1
$region0: #{galaxy_model.1}
  #allocation0 [shape = 'u32[]', space=smem, size = 0x4, offset = 0x4, fixed_abs, tag = 'smem constant byte address 0x4 - core index']
  #allocation1 [shape = 'u32[144,128]{1,0:T(1,128)}', space=vmem, size = 0x12000, scoped, tag = 'internal scratch']
  #allocation2 [shape = 'f32[8,128]{1,0:T(8,128)}', space=vmem, size = 0x1000, scoped, tag = 'scratch operand']
  %s0 = inlined_call_operand.vmem [shape: bf16[8,256,128], index: 0, kind: input, shape index: {}]
  %s1 = inlined_call_operand.vmem [shape: bf16[128,128], index: 1, kind: input, shape index: {}]
  %s2 = inlined_call_operand.vmem [shape: f32[1,128], index: 2, kind: input, shape index: {}]
  %s3 = inlined_call_operand.vmem [shape: bf16[128,128], index: 3, kind: input, shape index: {}]
  %s4 = inlined_call_operand.vmem [shape: f32[1,128], index: 4, kind: input, shape index: {}]
  %s5 = inlined_call_operand.vmem [shape: f32[1,128], index: 5, kind: input, shape index: {}]
  %s6 = inlined_call_operand.vmem [shape: f32[1,128], index: 6, kind: input, shape index: {}]
  %s7 = inlined_call_operand.vmem [shape: bf16[128,128], index: 7, kind: input, shape index: {}]
  %s8 = inlined_call_operand.vmem [shape: f32[1,128], index: 8, kind: input, shape index: {}]
  %s9 = inlined_call_operand.hbm [shape: f32[8,128], index: 9, kind: output, shape index: {}]
  %s10 = sld [smem:[#allocation0]]
  $region118: #{galaxy_model.1} parent=0
    _
  %s12 = ssub.s32 1, %s10
  %s13 = scalar_select 0, %s12, %s10
  $region1: #{galaxy_model.1} parent=0
    #allocation3 [shape = 'u8[262144]{0}', space=vmem, size = 0x40000, scoped, tag = 'input window, operand 0']
    #allocation4 [shape = 'u8[4096]{0}', space=vmem, size = 0x1000, scoped, tag = 'output window, operand 0, single buffered']
    #allocation5 [shape = 's32[2]{0}', space=sflag, size = 0x8, scoped, tag = 'scoped memory for galaxy_model.1']
    %14 = vsyncpa [#allocation5], 0
    loop: start=0, step=1, limit=6
    $region2: #{galaxy_model.1} parent=1 // loop_pre_header
      _
    $region3: #{galaxy_model.1} parent=1 // loop_header
      %s16 = sphi 0, %s20
      %p17 = scmp.ge.s32.totalorder %s16, 6
      %s26 = sphi 0, %s28
      %s29 = sphi 0, %s26
      %s30 = sphi 0, %s29
      %s46 = sphi 0, %s30
      %s50 = sphi 0, %s50
      %s52 = sphi 0, %s50
      %s53 = sphi 0, %s52
      %s67 = sphi 0, %s53
      %s71 = sphi 0, %s71
      %s73 = sphi 0, %s71
      %s74 = sphi 0, %s73
      %s88 = sphi 0, %s74
      %s92 = sphi 0, %s92
      %s94 = sphi 0, %s92
      %s95 = sphi 0, %s94
      %s109 = sphi 0, %s95
      %s113 = sphi 0, %s113
      %s115 = sphi 0, %s113
      %s116 = sphi 0, %s115
      %s130 = sphi 0, %s116
      %s134 = sphi 0, %s134
      %s136 = sphi 0, %s134
      %s137 = sphi 0, %s136
      %s151 = sphi 0, %s137
      %s155 = sphi 0, %s155
      %s157 = sphi 0, %s155
      %s158 = sphi 0, %s157
      %s172 = sphi 0, %s158
      %s176 = sphi 0, %s176
      %s178 = sphi 0, %s176
      %s179 = sphi 0, %s178
      %s193 = sphi 0, %s179
      %s197 = sphi 0, %s197
      %s199 = sphi 0, %s197
      %s200 = sphi 0, %s199
      %s214 = sphi 0, %s200
      %s218 = sphi 0, %s218
      %s220 = sphi 0, %s218
      %s221 = sphi 0, %s220
      %s235 = sphi 0, %s221
    $region4: #{galaxy_model.1} parent=1 // loop_header_branch
      %19 = sbr.rel (%p17) target = $region8
    $region5: #{galaxy_model.1} parent=1 // loop_body
      %s21 = ssub.s32 %s16, 1
      %s22 = ssub.s32 %s16, 2
      %s23 = sadd.s32 %s16, 1
      %s24 = ssub.s32 %s16, %s23
      %p25 = scmp.eq.s32.totalorder %s24, 0
      %s27 = sadd.s32 %s26, 1
      %s28 = scalar_select %p25, %s26, %s27
      %p31 = pneg %p25
      %p32 = scmp.eq.s32.totalorder %s16, 3
      %p33 = por %p31, %p32
      %p34 = scmp.ne.s32.totalorder %s26, %s29
      %p35 = scmp.eq.s32.totalorder %s16, 0
      %p36 = por %p34, %p35
      %p37 = scmp.ne.s32.totalorder %s26, %s29
      %p38 = scmp.eq.s32.totalorder %s21, 3
      %p39 = por %p37, %p38
      %p40 = scmp.ne.s32.totalorder %s29, %s30
      %p41 = scmp.eq.s32.totalorder %s21, 0
      %p42 = por %p40, %p41
      %p43 = scmp.ne.s32.totalorder %s29, %s30
      %p44 = scmp.eq.s32.totalorder %s22, 3
      %p45 = por %p43, %p44
      %p47 = scmp.ne.s32.totalorder %s30, %s46
      %p48 = scmp.eq.s32.totalorder %s22, 0
      %p49 = por %p47, %p48
      %s51 = sadd.s32 %s50, 1
      %p54 = scmp.eq.s32.totalorder %s16, 3
      %p55 = scmp.ne.s32.totalorder %s50, %s52
      %p56 = scmp.eq.s32.totalorder %s16, 0
      %p57 = por %p55, %p56
      %p58 = scmp.ne.s32.totalorder %s50, %s52
      %p59 = scmp.eq.s32.totalorder %s21, 3
      %p60 = por %p58, %p59
      %p61 = scmp.ne.s32.totalorder %s52, %s53
      %p62 = scmp.eq.s32.totalorder %s21, 0
      %p63 = por %p61, %p62
      %p64 = scmp.ne.s32.totalorder %s52, %s53
      %p65 = scmp.eq.s32.totalorder %s22, 3
      %p66 = por %p64, %p65
      %p68 = scmp.ne.s32.totalorder %s53, %s67
      %p69 = scmp.eq.s32.totalorder %s22, 0
      %p70 = por %p68, %p69
      %s72 = sadd.s32 %s71, 1
      %p75 = scmp.eq.s32.totalorder %s16, 3
      %p76 = scmp.ne.s32.totalorder %s71, %s73
      %p77 = scmp.eq.s32.totalorder %s16, 0
      %p78 = por %p76, %p77
      %p79 = scmp.ne.s32.totalorder %s71, %s73
      %p80 = scmp.eq.s32.totalorder %s21, 3
      %p81 = por %p79, %p80
      %p82 = scmp.ne.s32.totalorder %s73, %s74
      %p83 = scmp.eq.s32.totalorder %s21, 0
      %p84 = por %p82, %p83
      %p85 = scmp.ne.s32.totalorder %s73, %s74
      %p86 = scmp.eq.s32.totalorder %s22, 3
      %p87 = por %p85, %p86
      %p89 = scmp.ne.s32.totalorder %s74, %s88
      %p90 = scmp.eq.s32.totalorder %s22, 0
      %p91 = por %p89, %p90
      %s93 = sadd.s32 %s92, 1
      %p96 = scmp.eq.s32.totalorder %s16, 3
      %p97 = scmp.ne.s32.totalorder %s92, %s94
      %p98 = scmp.eq.s32.totalorder %s16, 0
      %p99 = por %p97, %p98
      %p100 = scmp.ne.s32.totalorder %s92, %s94
      %p101 = scmp.eq.s32.totalorder %s21, 3
      %p102 = por %p100, %p101
      %p103 = scmp.ne.s32.totalorder %s94, %s95
      %p104 = scmp.eq.s32.totalorder %s21, 0
      %p105 = por %p103, %p104
      %p106 = scmp.ne.s32.totalorder %s94, %s95
      %p107 = scmp.eq.s32.totalorder %s22, 3
      %p108 = por %p106, %p107
      %p110 = scmp.ne.s32.totalorder %s95, %s109
      %p111 = scmp.eq.s32.totalorder %s22, 0
      %p112 = por %p110, %p111
      %s114 = sadd.s32 %s113, 1
      %p117 = scmp.eq.s32.totalorder %s16, 3
      %p118 = scmp.ne.s32.totalorder %s113, %s115
      %p119 = scmp.eq.s32.totalorder %s16, 0
      %p120 = por %p118, %p119
      %p121 = scmp.ne.s32.totalorder %s113, %s115
      %p122 = scmp.eq.s32.totalorder %s21, 3
      %p123 = por %p121, %p122
      %p124 = scmp.ne.s32.totalorder %s115, %s116
      %p125 = scmp.eq.s32.totalorder %s21, 0
      %p126 = por %p124, %p125
      %p127 = scmp.ne.s32.totalorder %s115, %s116
      %p128 = scmp.eq.s32.totalorder %s22, 3
      %p129 = por %p127, %p128
      %p131 = scmp.ne.s32.totalorder %s116, %s130
      %p132 = scmp.eq.s32.totalorder %s22, 0
      %p133 = por %p131, %p132
      %s135 = sadd.s32 %s134, 1
      %p138 = scmp.eq.s32.totalorder %s16, 3
      %p139 = scmp.ne.s32.totalorder %s134, %s136
      %p140 = scmp.eq.s32.totalorder %s16, 0
      %p141 = por %p139, %p140
      %p142 = scmp.ne.s32.totalorder %s134, %s136
      %p143 = scmp.eq.s32.totalorder %s21, 3
      %p144 = por %p142, %p143
      %p145 = scmp.ne.s32.totalorder %s136, %s137
      %p146 = scmp.eq.s32.totalorder %s21, 0
      %p147 = por %p145, %p146
      %p148 = scmp.ne.s32.totalorder %s136, %s137
      %p149 = scmp.eq.s32.totalorder %s22, 3
      %p150 = por %p148, %p149
      %p152 = scmp.ne.s32.totalorder %s137, %s151
      %p153 = scmp.eq.s32.totalorder %s22, 0
      %p154 = por %p152, %p153
      %s156 = sadd.s32 %s155, 1
      %p159 = scmp.eq.s32.totalorder %s16, 3
      %p160 = scmp.ne.s32.totalorder %s155, %s157
      %p161 = scmp.eq.s32.totalorder %s16, 0
      %p162 = por %p160, %p161
      %p163 = scmp.ne.s32.totalorder %s155, %s157
      %p164 = scmp.eq.s32.totalorder %s21, 3
      %p165 = por %p163, %p164
      %p166 = scmp.ne.s32.totalorder %s157, %s158
      %p167 = scmp.eq.s32.totalorder %s21, 0
      %p168 = por %p166, %p167
      %p169 = scmp.ne.s32.totalorder %s157, %s158
      %p170 = scmp.eq.s32.totalorder %s22, 3
      %p171 = por %p169, %p170
      %p173 = scmp.ne.s32.totalorder %s158, %s172
      %p174 = scmp.eq.s32.totalorder %s22, 0
      %p175 = por %p173, %p174
      %s177 = sadd.s32 %s176, 1
      %p180 = scmp.eq.s32.totalorder %s16, 3
      %p181 = scmp.ne.s32.totalorder %s176, %s178
      %p182 = scmp.eq.s32.totalorder %s16, 0
      %p183 = por %p181, %p182
      %p184 = scmp.ne.s32.totalorder %s176, %s178
      %p185 = scmp.eq.s32.totalorder %s21, 3
      %p186 = por %p184, %p185
      %p187 = scmp.ne.s32.totalorder %s178, %s179
      %p188 = scmp.eq.s32.totalorder %s21, 0
      %p189 = por %p187, %p188
      %p190 = scmp.ne.s32.totalorder %s178, %s179
      %p191 = scmp.eq.s32.totalorder %s22, 3
      %p192 = por %p190, %p191
      %p194 = scmp.ne.s32.totalorder %s179, %s193
      %p195 = scmp.eq.s32.totalorder %s22, 0
      %p196 = por %p194, %p195
      %s198 = sadd.s32 %s197, 1
      %p201 = scmp.eq.s32.totalorder %s16, 3
      %p202 = scmp.ne.s32.totalorder %s197, %s199
      %p203 = scmp.eq.s32.totalorder %s16, 0
      %p204 = por %p202, %p203
      %p205 = scmp.ne.s32.totalorder %s197, %s199
      %p206 = scmp.eq.s32.totalorder %s21, 3
      %p207 = por %p205, %p206
      %p208 = scmp.ne.s32.totalorder %s199, %s200
      %p209 = scmp.eq.s32.totalorder %s21, 0
      %p210 = por %p208, %p209
      %p211 = scmp.ne.s32.totalorder %s199, %s200
      %p212 = scmp.eq.s32.totalorder %s22, 3
      %p213 = por %p211, %p212
      %p215 = scmp.ne.s32.totalorder %s200, %s214
      %p216 = scmp.eq.s32.totalorder %s22, 0
      %p217 = por %p215, %p216
      %s219 = sadd.s32 %s218, 1
      %p222 = scmp.eq.s32.totalorder %s16, 3
      %p223 = scmp.ne.s32.totalorder %s218, %s220
      %p224 = scmp.eq.s32.totalorder %s16, 0
      %p225 = por %p223, %p224
      %p226 = scmp.ne.s32.totalorder %s218, %s220
      %p227 = scmp.eq.s32.totalorder %s21, 3
      %p228 = por %p226, %p227
      %p229 = scmp.ne.s32.totalorder %s220, %s221
      %p230 = scmp.eq.s32.totalorder %s21, 0
      %p231 = por %p229, %p230
      %p232 = scmp.ne.s32.totalorder %s220, %s221
      %p233 = scmp.eq.s32.totalorder %s22, 3
      %p234 = por %p232, %p233
      %p236 = scmp.ne.s32.totalorder %s221, %s235
      %p237 = scmp.eq.s32.totalorder %s22, 0
      %p238 = por %p236, %p237
      %p239 = scmp.le.s32.totalorder 1, %s16
      %p240 = scmp.lt.s32.totalorder %s16, 5
      %p241 = pnand %p239, %p240
      %p242 = pneg %p241
      // Predicated region
      $region9: #{galaxy_model.1} parent=5 // pred_check
        _
      $region10: #{galaxy_model.1} parent=5 // pred_check_branch
        %244 = sbr.rel (%p241) target = $region12
      $region11: #{galaxy_model.1} parent=5 // pred_region
        %s245 = ssub.s32 %s16, 1
        // Predicated region
        $region13: #{galaxy_model.1} parent=11 // pred_check
          %p246 = pneg %p63
        $region14: #{galaxy_model.1} parent=11 // pred_check_branch
          %248 = sbr.rel (%p246) target = $region16
        $region15: #{galaxy_model.1} parent=11 // pred_region
          _
        $region16: #{galaxy_model.1} parent=11 // pred_fallthru
          _
        // Predicated region
        $region17: #{galaxy_model.1} parent=11 // pred_check
          %p249 = pneg %p84
        $region18: #{galaxy_model.1} parent=11 // pred_check_branch
          %251 = sbr.rel (%p249) target = $region20
        $region19: #{galaxy_model.1} parent=11 // pred_region
          _
        $region20: #{galaxy_model.1} parent=11 // pred_fallthru
          _
        // Predicated region
        $region21: #{galaxy_model.1} parent=11 // pred_check
          %p252 = pneg %p105
        $region22: #{galaxy_model.1} parent=11 // pred_check_branch
          %254 = sbr.rel (%p252) target = $region24
        $region23: #{galaxy_model.1} parent=11 // pred_region
          _
        $region24: #{galaxy_model.1} parent=11 // pred_fallthru
          _
        // Predicated region
        $region25: #{galaxy_model.1} parent=11 // pred_check
          %p255 = pneg %p126
        $region26: #{galaxy_model.1} parent=11 // pred_check_branch
          %257 = sbr.rel (%p255) target = $region28
        $region27: #{galaxy_model.1} parent=11 // pred_region
          _
        $region28: #{galaxy_model.1} parent=11 // pred_fallthru
          _
        // Predicated region
        $region29: #{galaxy_model.1} parent=11 // pred_check
          %p258 = pneg %p147
        $region30: #{galaxy_model.1} parent=11 // pred_check_branch
          %260 = sbr.rel (%p258) target = $region32
        $region31: #{galaxy_model.1} parent=11 // pred_region
          _
        $region32: #{galaxy_model.1} parent=11 // pred_fallthru
          _
        // Predicated region
        $region33: #{galaxy_model.1} parent=11 // pred_check
          %p261 = pneg %p168
        $region34: #{galaxy_model.1} parent=11 // pred_check_branch
          %263 = sbr.rel (%p261) target = $region36
        $region35: #{galaxy_model.1} parent=11 // pred_region
          _
        $region36: #{galaxy_model.1} parent=11 // pred_fallthru
          _
        // Predicated region
        $region37: #{galaxy_model.1} parent=11 // pred_check
          %p264 = pneg %p189
        $region38: #{galaxy_model.1} parent=11 // pred_check_branch
          %266 = sbr.rel (%p264) target = $region40
        $region39: #{galaxy_model.1} parent=11 // pred_region
          _
        $region40: #{galaxy_model.1} parent=11 // pred_fallthru
          _
        // Predicated region
        $region41: #{galaxy_model.1} parent=11 // pred_check
          %p267 = pneg %p210
        $region42: #{galaxy_model.1} parent=11 // pred_check_branch
          %269 = sbr.rel (%p267) target = $region44
        $region43: #{galaxy_model.1} parent=11 // pred_region
          _
        $region44: #{galaxy_model.1} parent=11 // pred_fallthru
          _
      $region12: #{galaxy_model.1} parent=5 // pred_fallthru
        _
      %p270 = scmp.lt.s32.totalorder %s16, 4
      // Predicated region
      $region45: #{galaxy_model.1} parent=5 // pred_check
        %p271 = pneg %p270
      $region46: #{galaxy_model.1} parent=5 // pred_check_branch
        %273 = sbr.rel (%p271) target = $region48
      $region47: #{galaxy_model.1} parent=5 // pred_region
        // Predicated region
        $region49: #{galaxy_model.1} parent=47 // pred_check
          %p274 = pneg %p36
        $region50: #{galaxy_model.1} parent=47 // pred_check_branch
          %276 = sbr.rel (%p274) target = $region52
        $region51: #{galaxy_model.1} parent=47 // pred_region
          %s277 = sand.u32 %s26, 1
          %s278 = sand.u32 %s26, 1
          %s279 = smul.addr %s278, 256
          %s280 = scalar_lea.vmem [#allocation3], %s279
          %s281 = smul.u32 8, %s16
          %s282 = smul.addr %s281, 4
          %s283 = scalar_lea.vmem %s0, %s282
          // Predicated region
          $region53: #{galaxy_model.1} parent=51 // pred_check
            _
          $region54: #{galaxy_model.1} parent=51 // pred_check_branch
            %285 = sbr.rel (0) target = $region56
          $region55: #{galaxy_model.1} parent=51 // pred_region
            // Predicated region
            $region57: #{galaxy_model.1} parent=55 // pred_check
              _
            $region58: #{galaxy_model.1} parent=55 // pred_check_branch
              %287 = sbr.rel target = $region60
            $region59: #{galaxy_model.1} parent=55 // pred_region
              // Predicated region
              $region72: #{galaxy_model.1} parent=59 // pred_check
                _
              $region73: #{galaxy_model.1} parent=59 // pred_check_branch
                %428 = sbr.rel (0) target = $region75
              $region74: #{galaxy_model.1} parent=59 // pred_region
                loop: start=0, step=1, limit=1
                $region76: #{galaxy_model.1} parent=74 // loop_pre_header
                  _
                $region77: #{galaxy_model.1} parent=74 // loop_header
                  %s430 = sphi 0, %s434
                  %p431 = scmp.ge.s32.totalorder %s430, 1
                  %s435 = sphi %s283, %s283
                  %s436 = sphi %s280, %s280
                $region78: #{galaxy_model.1} parent=74 // loop_header_branch
                  %433 = sbr.rel (%p431) target = $region82
                $region79: #{galaxy_model.1} parent=74 // loop_body
                  _
                $region80: #{galaxy_model.1} parent=74 // loop_footer
                  %s434 = sadd.s32 1, %s430
                $region81: #{galaxy_model.1} parent=74 // loop_footer_branch
                  %429 = sbr.rel target = $region77
                $region82: #{galaxy_model.1} parent=74 // loop_exit
                  _
                loop: start=0, step=1, limit=1
                $region83: #{galaxy_model.1} parent=74 // loop_pre_header
                  _
                $region84: #{galaxy_model.1} parent=74 // loop_header
                  %s439 = sphi 0, %s443
                  %p440 = scmp.ge.s32.totalorder %s439, 1
                  %s444 = sphi %s283, %s283
                  %s445 = sphi %s280, %s280
                $region85: #{galaxy_model.1} parent=74 // loop_header_branch
                  %442 = sbr.rel (%p440) target = $region89
                $region86: #{galaxy_model.1} parent=74 // loop_body
                  %v446 = vld [vmem:[%s444] sm:$0xf]
                  %447 = vst [vmem:[%s445] sm:$0xf] %v446
                  %v448 = vld [vmem:[%s444 + $0x4] sm:$0xf]
                  %449 = vst [vmem:[%s445 + $0x4] sm:$0xf] %v448
                  %v450 = vld [vmem:[%s444 + $0x8] sm:$0xf]
                  %451 = vst [vmem:[%s445 + $0x8] sm:$0xf] %v450
                  %v452 = vld [vmem:[%s444 + $0xc] sm:$0xf]
                  %453 = vst [vmem:[%s445 + $0xc] sm:$0xf] %v452
                  %v454 = vld [vmem:[%s444 + $0x10] sm:$0xf]
                  %455 = vst [vmem:[%s445 + $0x10] sm:$0xf] %v454
                  %v456 = vld [vmem:[%s444 + $0x14] sm:$0xf]
                  %457 = vst [vmem:[%s445 + $0x14] sm:$0xf] %v456
                  %v458 = vld [vmem:[%s444 + $0x18] sm:$0xf]
                  %459 = vst [vmem:[%s445 + $0x18] sm:$0xf] %v458
                  %v460 = vld [vmem:[%s444 + $0x1c] sm:$0xf]
                  %461 = vst [vmem:[%s445 + $0x1c] sm:$0xf] %v460
                  %v462 = vld [vmem:[%s444 + $0x80] sm:$0xf]
                  %463 = vst [vmem:[%s445 + $0x20] sm:$0xf] %v462
                  %v464 = vld [vmem:[%s444 + $0x84] sm:$0xf]
                  %465 = vst [vmem:[%s445 + $0x24] sm:$0xf] %v464
                  %v466 = vld [vmem:[%s444 + $0x88] sm:$0xf]
                  %467 = vst [vmem:[%s445 + $0x28] sm:$0xf] %v466
                  %v468 = vld [vmem:[%s444 + $0x8c] sm:$0xf]
                  %469 = vst [vmem:[%s445 + $0x2c] sm:$0xf] %v468
                  %v470 = vld [vmem:[%s444 + $0x90] sm:$0xf]
                  %471 = vst [vmem:[%s445 + $0x30] sm:$0xf] %v470
                  %v472 = vld [vmem:[%s444 + $0x94] sm:$0xf]
                  %473 = vst [vmem:[%s445 + $0x34] sm:$0xf] %v472
                  %v474 = vld [vmem:[%s444 + $0x98] sm:$0xf]
                  %475 = vst [vmem:[%s445 + $0x38] sm:$0xf] %v474
                  %v476 = vld [vmem:[%s444 + $0x9c] sm:$0xf]
                  %477 = vst [vmem:[%s445 + $0x3c] sm:$0xf] %v476
                  %v478 = vld [vmem:[%s444 + $0x100] sm:$0xf]
                  %479 = vst [vmem:[%s445 + $0x40] sm:$0xf] %v478
                  %v480 = vld [vmem:[%s444 + $0x104] sm:$0xf]
                  %481 = vst [vmem:[%s445 + $0x44] sm:$0xf] %v480
                  %v482 = vld [vmem:[%s444 + $0x108] sm:$0xf]
                  %483 = vst [vmem:[%s445 + $0x48] sm:$0xf] %v482
                  %v484 = vld [vmem:[%s444 + $0x10c] sm:$0xf]
                  %485 = vst [vmem:[%s445 + $0x4c] sm:$0xf] %v484
                  %v486 = vld [vmem:[%s444 + $0x110] sm:$0xf]
                  %487 = vst [vmem:[%s445 + $0x50] sm:$0xf] %v486
                  %v488 = vld [vmem:[%s444 + $0x114] sm:$0xf]
                  %489 = vst [vmem:[%s445 + $0x54] sm:$0xf] %v488
                  %v490 = vld [vmem:[%s444 + $0x118] sm:$0xf]
                  %491 = vst [vmem:[%s445 + $0x58] sm:$0xf] %v490
                  %v492 = vld [vmem:[%s444 + $0x11c] sm:$0xf]
                  %493 = vst [vmem:[%s445 + $0x5c] sm:$0xf] %v492
                  %v494 = vld [vmem:[%s444 + $0x180] sm:$0xf]
                  %495 = vst [vmem:[%s445 + $0x60] sm:$0xf] %v494
                  %v496 = vld [vmem:[%s444 + $0x184] sm:$0xf]
                  %497 = vst [vmem:[%s445 + $0x64] sm:$0xf] %v496
                  %v498 = vld [vmem:[%s444 + $0x188] sm:$0xf]
                  %499 = vst [vmem:[%s445 + $0x68] sm:$0xf] %v498
                  %v500 = vld [vmem:[%s444 + $0x18c] sm:$0xf]
                  %501 = vst [vmem:[%s445 + $0x6c] sm:$0xf] %v500
                  %v502 = vld [vmem:[%s444 + $0x190] sm:$0xf]
                  %503 = vst [vmem:[%s445 + $0x70] sm:$0xf] %v502
                  %v504 = vld [vmem:[%s444 + $0x194] sm:$0xf]
                  %505 = vst [vmem:[%s445 + $0x74] sm:$0xf] %v504
                  %v506 = vld [vmem:[%s444 + $0x198] sm:$0xf]
                  %507 = vst [vmem:[%s445 + $0x78] sm:$0xf] %v506
                  %v508 = vld [vmem:[%s444 + $0x19c] sm:$0xf]
                  %509 = vst [vmem:[%s445 + $0x7c] sm:$0xf] %v508
                  %v510 = vld [vmem:[%s444 + $0x200] sm:$0xf]
                  %511 = vst [vmem:[%s445 + $0x80] sm:$0xf] %v510
                  %v512 = vld [vmem:[%s444 + $0x204] sm:$0xf]
                  %513 = vst [vmem:[%s445 + $0x84] sm:$0xf] %v512
                  %v514 = vld [vmem:[%s444 + $0x208] sm:$0xf]
                  %515 = vst [vmem:[%s445 + $0x88] sm:$0xf] %v514
                  %v516 = vld [vmem:[%s444 + $0x20c] sm:$0xf]
                  %517 = vst [vmem:[%s445 + $0x8c] sm:$0xf] %v516
                  %v518 = vld [vmem:[%s444 + $0x210] sm:$0xf]
                  %519 = vst [vmem:[%s445 + $0x90] sm:$0xf] %v518
                  %v520 = vld [vmem:[%s444 + $0x214] sm:$0xf]
                  %521 = vst [vmem:[%s445 + $0x94] sm:$0xf] %v520
                  %v522 = vld [vmem:[%s444 + $0x218] sm:$0xf]
                  %523 = vst [vmem:[%s445 + $0x98] sm:$0xf] %v522
                  %v524 = vld [vmem:[%s444 + $0x21c] sm:$0xf]
                  %525 = vst [vmem:[%s445 + $0x9c] sm:$0xf] %v524
                  %v526 = vld [vmem:[%s444 + $0x280] sm:$0xf]
                  %527 = vst [vmem:[%s445 + $0xa0] sm:$0xf] %v526
                  %v528 = vld [vmem:[%s444 + $0x284] sm:$0xf]
                  %529 = vst [vmem:[%s445 + $0xa4] sm:$0xf] %v528
                  %v530 = vld [vmem:[%s444 + $0x288] sm:$0xf]
                  %531 = vst [vmem:[%s445 + $0xa8] sm:$0xf] %v530
                  %v532 = vld [vmem:[%s444 + $0x28c] sm:$0xf]
                  %533 = vst [vmem:[%s445 + $0xac] sm:$0xf] %v532
                  %v534 = vld [vmem:[%s444 + $0x290] sm:$0xf]
                  %535 = vst [vmem:[%s445 + $0xb0] sm:$0xf] %v534
                  %v536 = vld [vmem:[%s444 + $0x294] sm:$0xf]
                  %537 = vst [vmem:[%s445 + $0xb4] sm:$0xf] %v536
                  %v538 = vld [vmem:[%s444 + $0x298] sm:$0xf]
                  %539 = vst [vmem:[%s445 + $0xb8] sm:$0xf] %v538
                  %v540 = vld [vmem:[%s444 + $0x29c] sm:$0xf]
                  %541 = vst [vmem:[%s445 + $0xbc] sm:$0xf] %v540
                  %v542 = vld [vmem:[%s444 + $0x300] sm:$0xf]
                  %543 = vst [vmem:[%s445 + $0xc0] sm:$0xf] %v542
                  %v544 = vld [vmem:[%s444 + $0x304] sm:$0xf]
                  %545 = vst [vmem:[%s445 + $0xc4] sm:$0xf] %v544
                  %v546 = vld [vmem:[%s444 + $0x308] sm:$0xf]
                  %547 = vst [vmem:[%s445 + $0xc8] sm:$0xf] %v546
                  %v548 = vld [vmem:[%s444 + $0x30c] sm:$0xf]
                  %549 = vst [vmem:[%s445 + $0xcc] sm:$0xf] %v548
                  %v550 = vld [vmem:[%s444 + $0x310] sm:$0xf]
                  %551 = vst [vmem:[%s445 + $0xd0] sm:$0xf] %v550
                  %v552 = vld [vmem:[%s444 + $0x314] sm:$0xf]
                  %553 = vst [vmem:[%s445 + $0xd4] sm:$0xf] %v552
                  %v554 = vld [vmem:[%s444 + $0x318] sm:$0xf]
                  %555 = vst [vmem:[%s445 + $0xd8] sm:$0xf] %v554
                  %v556 = vld [vmem:[%s444 + $0x31c] sm:$0xf]
                  %557 = vst [vmem:[%s445 + $0xdc] sm:$0xf] %v556
                  %v558 = vld [vmem:[%s444 + $0x380] sm:$0xf]
                  %559 = vst [vmem:[%s445 + $0xe0] sm:$0xf] %v558
                  %v560 = vld [vmem:[%s444 + $0x384] sm:$0xf]
                  %561 = vst [vmem:[%s445 + $0xe4] sm:$0xf] %v560
                  %v562 = vld [vmem:[%s444 + $0x388] sm:$0xf]
                  %563 = vst [vmem:[%s445 + $0xe8] sm:$0xf] %v562
                  %v564 = vld [vmem:[%s444 + $0x38c] sm:$0xf]
                  %565 = vst [vmem:[%s445 + $0xec] sm:$0xf] %v564
                  %v566 = vld [vmem:[%s444 + $0x390] sm:$0xf]
                  %567 = vst [vmem:[%s445 + $0xf0] sm:$0xf] %v566
                  %v568 = vld [vmem:[%s444 + $0x394] sm:$0xf]
                  %569 = vst [vmem:[%s445 + $0xf4] sm:$0xf] %v568
                  %v570 = vld [vmem:[%s444 + $0x398] sm:$0xf]
                  %571 = vst [vmem:[%s445 + $0xf8] sm:$0xf] %v570
                  %v572 = vld [vmem:[%s444 + $0x39c] sm:$0xf]
                  %573 = vst [vmem:[%s445 + $0xfc] sm:$0xf] %v572
                $region87: #{galaxy_model.1} parent=74 // loop_footer
                  %s443 = sadd.s32 1, %s439
                $region88: #{galaxy_model.1} parent=74 // loop_footer_branch
                  %438 = sbr.rel target = $region84
                $region89: #{galaxy_model.1} parent=74 // loop_exit
                  _
              $region75: #{galaxy_model.1} parent=59 // pred_fallthru
                _
            $region60: #{galaxy_model.1} parent=55 // pred_fallthru
              _
            // Predicated region
            $region61: #{galaxy_model.1} parent=55 // pred_check
              _
            $region62: #{galaxy_model.1} parent=55 // pred_check_branch
              %289 = sbr.rel (0) target = $region64
            $region63: #{galaxy_model.1} parent=55 // pred_region
              loop: start=0, step=1, limit=1
              $region65: #{galaxy_model.1} parent=63 // loop_pre_header
                _
              $region66: #{galaxy_model.1} parent=63 // loop_header
                %s292 = sphi 0, %s296
                %p293 = scmp.ge.s32.totalorder %s292, 1
                %s297 = sphi %s283, %s283
                %s298 = sphi %s280, %s280
              $region67: #{galaxy_model.1} parent=63 // loop_header_branch
                %295 = sbr.rel (%p293) target = $region71
              $region68: #{galaxy_model.1} parent=63 // loop_body
                %v299 = vld [vmem:[%s297] sm:$0xf]
                %300 = vst [vmem:[%s298] sm:$0xf] %v299
                %v301 = vld [vmem:[%s297 + $0x4] sm:$0xf]
                %302 = vst [vmem:[%s298 + $0x4] sm:$0xf] %v301
                %v303 = vld [vmem:[%s297 + $0x8] sm:$0xf]
                %304 = vst [vmem:[%s298 + $0x8] sm:$0xf] %v303
                %v305 = vld [vmem:[%s297 + $0xc] sm:$0xf]
                %306 = vst [vmem:[%s298 + $0xc] sm:$0xf] %v305
                %v307 = vld [vmem:[%s297 + $0x10] sm:$0xf]
                %308 = vst [vmem:[%s298 + $0x10] sm:$0xf] %v307
                %v309 = vld [vmem:[%s297 + $0x14] sm:$0xf]
                %310 = vst [vmem:[%s298 + $0x14] sm:$0xf] %v309
                %v311 = vld [vmem:[%s297 + $0x18] sm:$0xf]
                %312 = vst [vmem:[%s298 + $0x18] sm:$0xf] %v311
                %v313 = vld [vmem:[%s297 + $0x1c] sm:$0xf]
                %314 = vst [vmem:[%s298 + $0x1c] sm:$0xf] %v313
                %v315 = vld [vmem:[%s297 + $0x80] sm:$0xf]
                %316 = vst [vmem:[%s298 + $0x20] sm:$0xf] %v315
                %v317 = vld [vmem:[%s297 + $0x84] sm:$0xf]
                %318 = vst [vmem:[%s298 + $0x24] sm:$0xf] %v317
                %v319 = vld [vmem:[%s297 + $0x88] sm:$0xf]
                %320 = vst [vmem:[%s298 + $0x28] sm:$0xf] %v319
                %v321 = vld [vmem:[%s297 + $0x8c] sm:$0xf]
                %322 = vst [vmem:[%s298 + $0x2c] sm:$0xf] %v321
                %v323 = vld [vmem:[%s297 + $0x90] sm:$0xf]
                %324 = vst [vmem:[%s298 + $0x30] sm:$0xf] %v323
                %v325 = vld [vmem:[%s297 + $0x94] sm:$0xf]
                %326 = vst [vmem:[%s298 + $0x34] sm:$0xf] %v325
                %v327 = vld [vmem:[%s297 + $0x98] sm:$0xf]
                %328 = vst [vmem:[%s298 + $0x38] sm:$0xf] %v327
                %v329 = vld [vmem:[%s297 + $0x9c] sm:$0xf]
                %330 = vst [vmem:[%s298 + $0x3c] sm:$0xf] %v329
                %v331 = vld [vmem:[%s297 + $0x100] sm:$0xf]
                %332 = vst [vmem:[%s298 + $0x40] sm:$0xf] %v331
                %v333 = vld [vmem:[%s297 + $0x104] sm:$0xf]
                %334 = vst [vmem:[%s298 + $0x44] sm:$0xf] %v333
                %v335 = vld [vmem:[%s297 + $0x108] sm:$0xf]
                %336 = vst [vmem:[%s298 + $0x48] sm:$0xf] %v335
                %v337 = vld [vmem:[%s297 + $0x10c] sm:$0xf]
                %338 = vst [vmem:[%s298 + $0x4c] sm:$0xf] %v337
                %v339 = vld [vmem:[%s297 + $0x110] sm:$0xf]
                %340 = vst [vmem:[%s298 + $0x50] sm:$0xf] %v339
                %v341 = vld [vmem:[%s297 + $0x114] sm:$0xf]
                %342 = vst [vmem:[%s298 + $0x54] sm:$0xf] %v341
                %v343 = vld [vmem:[%s297 + $0x118] sm:$0xf]
                %344 = vst [vmem:[%s298 + $0x58] sm:$0xf] %v343
                %v345 = vld [vmem:[%s297 + $0x11c] sm:$0xf]
                %346 = vst [vmem:[%s298 + $0x5c] sm:$0xf] %v345
                %v347 = vld [vmem:[%s297 + $0x180] sm:$0xf]
                %348 = vst [vmem:[%s298 + $0x60] sm:$0xf] %v347
                %v349 = vld [vmem:[%s297 + $0x184] sm:$0xf]
                %350 = vst [vmem:[%s298 + $0x64] sm:$0xf] %v349
                %v351 = vld [vmem:[%s297 + $0x188] sm:$0xf]
                %352 = vst [vmem:[%s298 + $0x68] sm:$0xf] %v351
                %v353 = vld [vmem:[%s297 + $0x18c] sm:$0xf]
                %354 = vst [vmem:[%s298 + $0x6c] sm:$0xf] %v353
                %v355 = vld [vmem:[%s297 + $0x190] sm:$0xf]
                %356 = vst [vmem:[%s298 + $0x70] sm:$0xf] %v355
                %v357 = vld [vmem:[%s297 + $0x194] sm:$0xf]
                %358 = vst [vmem:[%s298 + $0x74] sm:$0xf] %v357
                %v359 = vld [vmem:[%s297 + $0x198] sm:$0xf]
                %360 = vst [vmem:[%s298 + $0x78] sm:$0xf] %v359
                %v361 = vld [vmem:[%s297 + $0x19c] sm:$0xf]
                %362 = vst [vmem:[%s298 + $0x7c] sm:$0xf] %v361
                %v363 = vld [vmem:[%s297 + $0x200] sm:$0xf]
                %364 = vst [vmem:[%s298 + $0x80] sm:$0xf] %v363
                %v365 = vld [vmem:[%s297 + $0x204] sm:$0xf]
                %366 = vst [vmem:[%s298 + $0x84] sm:$0xf] %v365
                %v367 = vld [vmem:[%s297 + $0x208] sm:$0xf]
                %368 = vst [vmem:[%s298 + $0x88] sm:$0xf] %v367
                %v369 = vld [vmem:[%s297 + $0x20c] sm:$0xf]
                %370 = vst [vmem:[%s298 + $0x8c] sm:$0xf] %v369
                %v371 = vld [vmem:[%s297 + $0x210] sm:$0xf]
                %372 = vst [vmem:[%s298 + $0x90] sm:$0xf] %v371
                %v373 = vld [vmem:[%s297 + $0x214] sm:$0xf]
                %374 = vst [vmem:[%s298 + $0x94] sm:$0xf] %v373
                %v375 = vld [vmem:[%s297 + $0x218] sm:$0xf]
                %376 = vst [vmem:[%s298 + $0x98] sm:$0xf] %v375
                %v377 = vld [vmem:[%s297 + $0x21c] sm:$0xf]
                %378 = vst [vmem:[%s298 + $0x9c] sm:$0xf] %v377
                %v379 = vld [vmem:[%s297 + $0x280] sm:$0xf]
                %380 = vst [vmem:[%s298 + $0xa0] sm:$0xf] %v379
                %v381 = vld [vmem:[%s297 + $0x284] sm:$0xf]
                %382 = vst [vmem:[%s298 + $0xa4] sm:$0xf] %v381
                %v383 = vld [vmem:[%s297 + $0x288] sm:$0xf]
                %384 = vst [vmem:[%s298 + $0xa8] sm:$0xf] %v383
                %v385 = vld [vmem:[%s297 + $0x28c] sm:$0xf]
                %386 = vst [vmem:[%s298 + $0xac] sm:$0xf] %v385
                %v387 = vld [vmem:[%s297 + $0x290] sm:$0xf]
                %388 = vst [vmem:[%s298 + $0xb0] sm:$0xf] %v387
                %v389 = vld [vmem:[%s297 + $0x294] sm:$0xf]
                %390 = vst [vmem:[%s298 + $0xb4] sm:$0xf] %v389
                %v391 = vld [vmem:[%s297 + $0x298] sm:$0xf]
                %392 = vst [vmem:[%s298 + $0xb8] sm:$0xf] %v391
                %v393 = vld [vmem:[%s297 + $0x29c] sm:$0xf]
                %394 = vst [vmem:[%s298 + $0xbc] sm:$0xf] %v393
                %v395 = vld [vmem:[%s297 + $0x300] sm:$0xf]
                %396 = vst [vmem:[%s298 + $0xc0] sm:$0xf] %v395
                %v397 = vld [vmem:[%s297 + $0x304] sm:$0xf]
                %398 = vst [vmem:[%s298 + $0xc4] sm:$0xf] %v397
                %v399 = vld [vmem:[%s297 + $0x308] sm:$0xf]
                %400 = vst [vmem:[%s298 + $0xc8] sm:$0xf] %v399
                %v401 = vld [vmem:[%s297 + $0x30c] sm:$0xf]
                %402 = vst [vmem:[%s298 + $0xcc] sm:$0xf] %v401
                %v403 = vld [vmem:[%s297 + $0x310] sm:$0xf]
                %404 = vst [vmem:[%s298 + $0xd0] sm:$0xf] %v403
                %v405 = vld [vmem:[%s297 + $0x314] sm:$0xf]
                %406 = vst [vmem:[%s298 + $0xd4] sm:$0xf] %v405
                %v407 = vld [vmem:[%s297 + $0x318] sm:$0xf]
                %408 = vst [vmem:[%s298 + $0xd8] sm:$0xf] %v407
                %v409 = vld [vmem:[%s297 + $0x31c] sm:$0xf]
                %410 = vst [vmem:[%s298 + $0xdc] sm:$0xf] %v409
                %v411 = vld [vmem:[%s297 + $0x380] sm:$0xf]
                %412 = vst [vmem:[%s298 + $0xe0] sm:$0xf] %v411
                %v413 = vld [vmem:[%s297 + $0x384] sm:$0xf]
                %414 = vst [vmem:[%s298 + $0xe4] sm:$0xf] %v413
                %v415 = vld [vmem:[%s297 + $0x388] sm:$0xf]
                %416 = vst [vmem:[%s298 + $0xe8] sm:$0xf] %v415
                %v417 = vld [vmem:[%s297 + $0x38c] sm:$0xf]
                %418 = vst [vmem:[%s298 + $0xec] sm:$0xf] %v417
                %v419 = vld [vmem:[%s297 + $0x390] sm:$0xf]
                %420 = vst [vmem:[%s298 + $0xf0] sm:$0xf] %v419
                %v421 = vld [vmem:[%s297 + $0x394] sm:$0xf]
                %422 = vst [vmem:[%s298 + $0xf4] sm:$0xf] %v421
                %v423 = vld [vmem:[%s297 + $0x398] sm:$0xf]
                %424 = vst [vmem:[%s298 + $0xf8] sm:$0xf] %v423
                %v425 = vld [vmem:[%s297 + $0x39c] sm:$0xf]
                %426 = vst [vmem:[%s298 + $0xfc] sm:$0xf] %v425
              $region69: #{galaxy_model.1} parent=63 // loop_footer
                %s296 = sadd.s32 1, %s292
              $region70: #{galaxy_model.1} parent=63 // loop_footer_branch
                %291 = sbr.rel target = $region66
              $region71: #{galaxy_model.1} parent=63 // loop_exit
                _
            $region64: #{galaxy_model.1} parent=55 // pred_fallthru
              _
          $region56: #{galaxy_model.1} parent=51 // pred_fallthru
            _
          %574 = vnop
        $region52: #{galaxy_model.1} parent=47 // pred_fallthru
          _
      $region48: #{galaxy_model.1} parent=5 // pred_fallthru
        _
      %p575 = scmp.le.s32.totalorder 1, %s16
      %p576 = scmp.lt.s32.totalorder %s16, 5
      %p577 = pnand %p575, %p576
      %p578 = pneg %p577
      // Predicated region
      $region90: #{galaxy_model.1} parent=5 // pred_check
        _
      $region91: #{galaxy_model.1} parent=5 // pred_check_branch
        %580 = sbr.rel (%p577) target = $region93
      $region92: #{galaxy_model.1} parent=5 // pred_region
        %s581 = ssub.s32 %s16, 1
        %s582 = sand.u32 %s29, 1
        %s583 = sand.u32 %s29, 1
        %s584 = smul.addr %s583, 256
        %s585 = scalar_lea.vmem [#allocation3], %s584
        // Predicated region
        $region94: #{galaxy_model.1} parent=92 // pred_check
          %p586 = pneg %p42
        $region95: #{galaxy_model.1} parent=92 // pred_check_branch
          %588 = sbr.rel (%p586) target = $region97
        $region96: #{galaxy_model.1} parent=92 // pred_region
          _
        $region97: #{galaxy_model.1} parent=92 // pred_fallthru
          _
        %s589 = sand.u32 %s29, 1
        %s590 = sand.u32 %s29, 1
        %s591 = smul.addr %s590, 256
        %s592 = scalar_lea.vmem [#allocation3], %s591
        %p593 = pneg %p42
        %p594 = pneg %p39
        %p595 = pneg %p63
        %p596 = pneg %p60
        %p597 = pneg %p84
        %p598 = pneg %p81
        %p599 = pneg %p105
        %p600 = pneg %p102
        %p601 = pneg %p126
        %p602 = pneg %p123
        %p603 = pneg %p147
        %p604 = pneg %p144
        %p605 = pneg %p168
        %p606 = pneg %p165
        %p607 = pneg %p189
        %p608 = pneg %p186
        %p609 = pneg %p210
        %p610 = pneg %p207
        %p611 = pneg %p231
        %p612 = pneg %p228
        %s613 = smul.u32 8, %s21
        %p615 = scmp.eq.s32.totalorder %s21, 0
        // Predicated region
        $region98: #{galaxy_model.1} parent=92 // pred_check
          %p616 = pneg %p615
        $region99: #{galaxy_model.1} parent=92 // pred_check_branch
          %618 = sbr.rel (%p616) target = $region101
        $region100: #{galaxy_model.1} parent=92 // pred_region
          %619 = vst [vmem:[#allocation2] sm:$0xff] 0.0
        $region101: #{galaxy_model.1} parent=92 // pred_fallthru
          _
        %v620 = vld [vmem:[%s585] sm:$0xf]
        %v621 = vld [vmem:[%s585 + $0x4] sm:$0xf]
        %v622 = vld [vmem:[%s585 + $0x8] sm:$0xf]
        %v623 = vld [vmem:[%s585 + $0xc] sm:$0xf]
        %v624 = vld [vmem:[%s585 + $0x10] sm:$0xf]
        %v625 = vld [vmem:[%s585 + $0x14] sm:$0xf]
        %v626 = vld [vmem:[%s585 + $0x18] sm:$0xf]
        %v627 = vld [vmem:[%s585 + $0x1c] sm:$0xf]
        %v628 = vld [vmem:[%s585 + $0x20] sm:$0xf]
        %v629 = vld [vmem:[%s585 + $0x24] sm:$0xf]
        %v630 = vld [vmem:[%s585 + $0x28] sm:$0xf]
        %v631 = vld [vmem:[%s585 + $0x2c] sm:$0xf]
        %v632 = vld [vmem:[%s585 + $0x30] sm:$0xf]
        %v633 = vld [vmem:[%s585 + $0x34] sm:$0xf]
        %v634 = vld [vmem:[%s585 + $0x38] sm:$0xf]
        %v635 = vld [vmem:[%s585 + $0x3c] sm:$0xf]
        %v636 = vld [vmem:[%s585 + $0x40] sm:$0xf]
        %v637 = vld [vmem:[%s585 + $0x44] sm:$0xf]
        %v638 = vld [vmem:[%s585 + $0x48] sm:$0xf]
        %v639 = vld [vmem:[%s585 + $0x4c] sm:$0xf]
        %v640 = vld [vmem:[%s585 + $0x50] sm:$0xf]
        %v641 = vld [vmem:[%s585 + $0x54] sm:$0xf]
        %v642 = vld [vmem:[%s585 + $0x58] sm:$0xf]
        %v643 = vld [vmem:[%s585 + $0x5c] sm:$0xf]
        %v644 = vld [vmem:[%s585 + $0x60] sm:$0xf]
        %v645 = vld [vmem:[%s585 + $0x64] sm:$0xf]
        %v646 = vld [vmem:[%s585 + $0x68] sm:$0xf]
        %v647 = vld [vmem:[%s585 + $0x6c] sm:$0xf]
        %v648 = vld [vmem:[%s585 + $0x70] sm:$0xf]
        %v649 = vld [vmem:[%s585 + $0x74] sm:$0xf]
        %v650 = vld [vmem:[%s585 + $0x78] sm:$0xf]
        %v651 = vld [vmem:[%s585 + $0x7c] sm:$0xf]
        %v652 = vld [vmem:[%s585 + $0x80] sm:$0xf]
        %v653 = vld [vmem:[%s585 + $0x84] sm:$0xf]
        %v654 = vld [vmem:[%s585 + $0x88] sm:$0xf]
        %v655 = vld [vmem:[%s585 + $0x8c] sm:$0xf]
        %v656 = vld [vmem:[%s585 + $0x90] sm:$0xf]
        %v657 = vld [vmem:[%s585 + $0x94] sm:$0xf]
        %v658 = vld [vmem:[%s585 + $0x98] sm:$0xf]
        %v659 = vld [vmem:[%s585 + $0x9c] sm:$0xf]
        %v660 = vld [vmem:[%s585 + $0xa0] sm:$0xf]
        %v661 = vld [vmem:[%s585 + $0xa4] sm:$0xf]
        %v662 = vld [vmem:[%s585 + $0xa8] sm:$0xf]
        %v663 = vld [vmem:[%s585 + $0xac] sm:$0xf]
        %v664 = vld [vmem:[%s585 + $0xb0] sm:$0xf]
        %v665 = vld [vmem:[%s585 + $0xb4] sm:$0xf]
        %v666 = vld [vmem:[%s585 + $0xb8] sm:$0xf]
        %v667 = vld [vmem:[%s585 + $0xbc] sm:$0xf]
        %v668 = vld [vmem:[%s585 + $0xc0] sm:$0xf]
        %v669 = vld [vmem:[%s585 + $0xc4] sm:$0xf]
        %v670 = vld [vmem:[%s585 + $0xc8] sm:$0xf]
        %v671 = vld [vmem:[%s585 + $0xcc] sm:$0xf]
        %v672 = vld [vmem:[%s585 + $0xd0] sm:$0xf]
        %v673 = vld [vmem:[%s585 + $0xd4] sm:$0xf]
        %v674 = vld [vmem:[%s585 + $0xd8] sm:$0xf]
        %v675 = vld [vmem:[%s585 + $0xdc] sm:$0xf]
        %v676 = vld [vmem:[%s585 + $0xe0] sm:$0xf]
        %v677 = vld [vmem:[%s585 + $0xe4] sm:$0xf]
        %v678 = vld [vmem:[%s585 + $0xe8] sm:$0xf]
        %v679 = vld [vmem:[%s585 + $0xec] sm:$0xf]
        %v680 = vld [vmem:[%s585 + $0xf0] sm:$0xf]
        %v681 = vld [vmem:[%s585 + $0xf4] sm:$0xf]
        %v682 = vld [vmem:[%s585 + $0xf8] sm:$0xf]
        %v683 = vld [vmem:[%s585 + $0xfc] sm:$0xf]
        %v684 = vld [vmem:[%s1] sm:$0xf]
        %v685 = vld [vmem:[%s1 + $0x4] sm:$0xf]
        %v686 = vld [vmem:[%s1 + $0x8] sm:$0xf]
        %v687 = vld [vmem:[%s1 + $0xc] sm:$0xf]
        %v688 = vld [vmem:[%s1 + $0x10] sm:$0xf]
        %v689 = vld [vmem:[%s1 + $0x14] sm:$0xf]
        %v690 = vld [vmem:[%s1 + $0x18] sm:$0xf]
        %v691 = vld [vmem:[%s1 + $0x1c] sm:$0xf]
        %v692 = vld [vmem:[%s1 + $0x20] sm:$0xf]
        %v693 = vld [vmem:[%s1 + $0x24] sm:$0xf]
        %v694 = vld [vmem:[%s1 + $0x28] sm:$0xf]
        %v695 = vld [vmem:[%s1 + $0x2c] sm:$0xf]
        %v696 = vld [vmem:[%s1 + $0x30] sm:$0xf]
        %v697 = vld [vmem:[%s1 + $0x34] sm:$0xf]
        %v698 = vld [vmem:[%s1 + $0x38] sm:$0xf]
        %v699 = vld [vmem:[%s1 + $0x3c] sm:$0xf]
        %v700 = vld [vmem:[%s2] sm:$0x1]
        %v702 = vlaneseq
        %v703 = vshrl.u32 %v702, 7
        %v704 = vsub.s32 0, %v703
        %v705 = vrot.slane %v700, %v704
        %v771 = vunpack.c.l.b16 %v620
        %v772 = vunpack.c.l.b16 %v621
        %v773 = vunpack.c.l.b16 %v622
        %v774 = vunpack.c.l.b16 %v623
        %v775 = vunpack.c.l.b16 %v624
        %v776 = vunpack.c.l.b16 %v625
        %v777 = vunpack.c.l.b16 %v626
        %v778 = vunpack.c.l.b16 %v627
        %v779 = vunpack.c.l.b16 %v628
        %v780 = vunpack.c.l.b16 %v629
        %v781 = vunpack.c.l.b16 %v630
        %v782 = vunpack.c.l.b16 %v631
        %v783 = vunpack.c.l.b16 %v632
        %v784 = vunpack.c.l.b16 %v633
        %v785 = vunpack.c.l.b16 %v634
        %v786 = vunpack.c.l.b16 %v635
        %v787 = vunpack.c.l.b16 %v636
        %v788 = vunpack.c.l.b16 %v637
        %v789 = vunpack.c.l.b16 %v638
        %v790 = vunpack.c.l.b16 %v639
        %v791 = vunpack.c.l.b16 %v640
        %v792 = vunpack.c.l.b16 %v641
        %v793 = vunpack.c.l.b16 %v642
        %v794 = vunpack.c.l.b16 %v643
        %v795 = vunpack.c.l.b16 %v644
        %v796 = vunpack.c.l.b16 %v645
        %v797 = vunpack.c.l.b16 %v646
        %v798 = vunpack.c.l.b16 %v647
        %v799 = vunpack.c.l.b16 %v648
        %v800 = vunpack.c.l.b16 %v649
        %v801 = vunpack.c.l.b16 %v650
        %v802 = vunpack.c.l.b16 %v651
        %v803 = vunpack.c.l.b16 %v652
        %v804 = vunpack.c.l.b16 %v653
        %v805 = vunpack.c.l.b16 %v654
        %v806 = vunpack.c.l.b16 %v655
        %v807 = vunpack.c.l.b16 %v656
        %v808 = vunpack.c.l.b16 %v657
        %v809 = vunpack.c.l.b16 %v658
        %v810 = vunpack.c.l.b16 %v659
        %v811 = vunpack.c.l.b16 %v660
        %v812 = vunpack.c.l.b16 %v661
        %v813 = vunpack.c.l.b16 %v662
        %v814 = vunpack.c.l.b16 %v663
        %v815 = vunpack.c.l.b16 %v664
        %v816 = vunpack.c.l.b16 %v665
        %v817 = vunpack.c.l.b16 %v666
        %v818 = vunpack.c.l.b16 %v667
        %v819 = vunpack.c.l.b16 %v668
        %v820 = vunpack.c.l.b16 %v669
        %v821 = vunpack.c.l.b16 %v670
        %v822 = vunpack.c.l.b16 %v671
        %v823 = vunpack.c.l.b16 %v672
        %v824 = vunpack.c.l.b16 %v673
        %v825 = vunpack.c.l.b16 %v674
        %v826 = vunpack.c.l.b16 %v675
        %v827 = vunpack.c.l.b16 %v676
        %v828 = vunpack.c.l.b16 %v677
        %v829 = vunpack.c.l.b16 %v678
        %v830 = vunpack.c.l.b16 %v679
        %v831 = vunpack.c.l.b16 %v680
        %v832 = vunpack.c.l.b16 %v681
        %v833 = vunpack.c.l.b16 %v682
        %v834 = vunpack.c.l.b16 %v683
        %v835 = vpack.c.b16 %v772, %v771
        %v836 = vpack.c.b16 %v774, %v773
        %v837 = vpack.c.b16 %v776, %v775
        %v838 = vpack.c.b16 %v778, %v777
        %v839 = vpack.c.b16 %v780, %v779
        %v840 = vpack.c.b16 %v782, %v781
        %v841 = vpack.c.b16 %v784, %v783
        %v842 = vpack.c.b16 %v786, %v785
        %v843 = vpack.c.b16 %v788, %v787
        %v844 = vpack.c.b16 %v790, %v789
        %v845 = vpack.c.b16 %v792, %v791
        %v846 = vpack.c.b16 %v794, %v793
        %v847 = vpack.c.b16 %v796, %v795
        %v848 = vpack.c.b16 %v798, %v797
        %v849 = vpack.c.b16 %v800, %v799
        %v850 = vpack.c.b16 %v802, %v801
        %v851 = vpack.c.b16 %v804, %v803
        %v852 = vpack.c.b16 %v806, %v805
        %v853 = vpack.c.b16 %v808, %v807
        %v854 = vpack.c.b16 %v810, %v809
        %v855 = vpack.c.b16 %v812, %v811
        %v856 = vpack.c.b16 %v814, %v813
        %v857 = vpack.c.b16 %v816, %v815
        %v858 = vpack.c.b16 %v818, %v817
        %v859 = vpack.c.b16 %v820, %v819
        %v860 = vpack.c.b16 %v822, %v821
        %v861 = vpack.c.b16 %v824, %v823
        %v862 = vpack.c.b16 %v826, %v825
        %v863 = vpack.c.b16 %v828, %v827
        %v864 = vpack.c.b16 %v830, %v829
        %v865 = vpack.c.b16 %v832, %v831
        %v866 = vpack.c.b16 %v834, %v833
        %v915 = vunpack.c.l.b16 %v684
        %v916 = vunpack.c.l.b16 %v685
        %v917 = vunpack.c.l.b16 %v686
        %v918 = vunpack.c.l.b16 %v687
        %v919 = vunpack.c.l.b16 %v688
        %v920 = vunpack.c.l.b16 %v689
        %v921 = vunpack.c.l.b16 %v690
        %v922 = vunpack.c.l.b16 %v691
        %v923 = vunpack.c.l.b16 %v692
        %v924 = vunpack.c.l.b16 %v693
        %v925 = vunpack.c.l.b16 %v694
        %v926 = vunpack.c.l.b16 %v695
        %v927 = vunpack.c.l.b16 %v696
        %v928 = vunpack.c.l.b16 %v697
        %v929 = vunpack.c.l.b16 %v698
        %v930 = vunpack.c.l.b16 %v699
        %v931 = vpack.c.b16 %v916, %v915
        %v932 = vpack.c.b16 %v918, %v917
        %v933 = vpack.c.b16 %v920, %v919
        %v934 = vpack.c.b16 %v922, %v921
        %v935 = vpack.c.b16 %v924, %v923
        %v936 = vpack.c.b16 %v926, %v925
        %v937 = vpack.c.b16 %v928, %v927
        %v938 = vpack.c.b16 %v930, %v929
        %947 = vmatprep.subr.bf16.mxu0 0
        %948 = vmatpush1.bf16.msra.mxu0 %v931
        %949 = vmatprep.subr.bf16.mxu0 0
        %950 = vmatpush1.bf16.msra.mxu0 %v932
        %951 = vmatprep.subr.bf16.mxu0 0
        %952 = vmatpush1.bf16.msra.mxu0 %v933
        %953 = vmatprep.subr.bf16.mxu0 0
        %954 = vmatpush1.bf16.msra.mxu0 %v934
        %955 = vmatprep.subr.bf16.mxu0 0
        %956 = vmatpush1.bf16.msra.mxu0 %v935
        %957 = vmatprep.subr.bf16.mxu0 0
        %958 = vmatpush1.bf16.msra.mxu0 %v936
        %959 = vmatprep.subr.bf16.mxu0 0
        %960 = vmatpush1.bf16.msra.mxu0 %v937
        %961 = vmatprep.subr.bf16.mxu0 0
        %962 = vmatpush1.bf16.msra.mxu0 %v938
        %963 = vmatprep.subr.bf16.mxu0 0
        %964 = vmatpush1.bf16.msra.mxu0 0
        %965 = vmatprep.subr.bf16.mxu0 0
        %966 = vmatpush1.bf16.msra.mxu0 0
        %967 = vmatprep.subr.bf16.mxu0 0
        %968 = vmatpush1.bf16.msra.mxu0 0
        %969 = vmatprep.subr.bf16.mxu0 0
        %970 = vmatpush1.bf16.msra.mxu0 0
        %971 = vmatprep.subr.bf16.mxu0 0
        %972 = vmatpush1.bf16.msra.mxu0 0
        %973 = vmatprep.subr.bf16.mxu0 0
        %974 = vmatpush1.bf16.msra.mxu0 0
        %975 = vmatprep.subr.bf16.mxu0 0
        %976 = vmatpush1.bf16.msra.mxu0 0
        %977 = vmatprep.subr.bf16.mxu0 0
        %978 = vmatpush1.bf16.msra.mxu0 0
        %979 = vmatprep.mubr.bf16.mxu0 0
        %980 = vmatmul.mubr.bf16.gmra.mrb[0].mxu0 %v835
        %v981 = vpop.f32.mrb[0].mxu0
        %v982 = vadd.f32 %v705, %v981
        %v983 = vpop.f32.mrb[0].mxu0
        %v984 = vpop.f32.mrb[0].mxu0
        %v985 = vadd.f32 %v705, %v984
        %v986 = vpop.f32.mrb[0].mxu0
        %987 = vmatprep.mubr.bf16.mxu0 0
        %988 = vmatmul.mubr.bf16.gmra.mrb[0].mxu0 %v836
        %v989 = vpop.f32.mrb[0].mxu0
        %v990 = vadd.f32 %v705, %v989
        %v991 = vpop.f32.mrb[0].mxu0
        %v992 = vpop.f32.mrb[0].mxu0
        %v993 = vadd.f32 %v705, %v992
        %v994 = vpop.f32.mrb[0].mxu0
        %995 = vmatprep.mubr.bf16.mxu0 0
        %996 = vmatmul.mubr.bf16.gmra.mrb[0].mxu0 %v837
        %v997 = vpop.f32.mrb[0].mxu0
        %v998 = vadd.f32 %v705, %v997
        %v999 = vpop.f32.mrb[0].mxu0
        %v1000 = vpop.f32.mrb[0].mxu0
        %v1001 = vadd.f32 %v705, %v1000
        %v1002 = vpop.f32.mrb[0].mxu0
        %1003 = vmatprep.mubr.bf16.mxu0 0
        %1004 = vmatmul.mubr.bf16.gmra.mrb[0].mxu0 %v838
        %v1005 = vpop.f32.mrb[0].mxu0
        %v1006 = vadd.f32 %v705, %v1005
        %v1007 = vpop.f32.mrb[0].mxu0
        %v1008 = vpop.f32.mrb[0].mxu0
        %v1009 = vadd.f32 %v705, %v1008
        %v1010 = vpop.f32.mrb[0].mxu0
        %1011 = vmatprep.mubr.bf16.mxu0 0
        %1012 = vmatmul.mubr.bf16.gmra.mrb[0].mxu0 %v839
        %v1013 = vpop.f32.mrb[0].mxu0
        %v1014 = vadd.f32 %v705, %v1013
        %v1015 = vpop.f32.mrb[0].mxu0
        %v1016 = vpop.f32.mrb[0].mxu0
        %v1017 = vadd.f32 %v705, %v1016
        %v1018 = vpop.f32.mrb[0].mxu0
        %1019 = vmatprep.mubr.bf16.mxu0 0
        %1020 = vmatmul.mubr.bf16.gmra.mrb[0].mxu0 %v840
        %v1021 = vpop.f32.mrb[0].mxu0
        %v1022 = vadd.f32 %v705, %v1021
        %v1023 = vpop.f32.mrb[0].mxu0
        %v1024 = vpop.f32.mrb[0].mxu0
        %v1025 = vadd.f32 %v705, %v1024
        %v1026 = vpop.f32.mrb[0].mxu0
        %1027 = vmatprep.mubr.bf16.mxu0 0
        %1028 = vmatmul.mubr.bf16.gmra.mrb[0].mxu0 %v841
        %v1029 = vpop.f32.mrb[0].mxu0
        %v1030 = vadd.f32 %v705, %v1029
        %v1031 = vpop.f32.mrb[0].mxu0
        %v1032 = vpop.f32.mrb[0].mxu0
        %v1033 = vadd.f32 %v705, %v1032
        %v1034 = vpop.f32.mrb[0].mxu0
        %1035 = vmatprep.mubr.bf16.mxu0 0
        %1036 = vmatmul.mubr.bf16.gmra.mrb[0].mxu0 %v842
        %v1037 = vpop.f32.mrb[0].mxu0
        %v1038 = vadd.f32 %v705, %v1037
        %v1039 = vpop.f32.mrb[0].mxu0
        %v1040 = vpop.f32.mrb[0].mxu0
        %v1041 = vadd.f32 %v705, %v1040
        %v1042 = vpop.f32.mrb[0].mxu0
        %1043 = vmatprep.mubr.bf16.mxu0 0
        %1044 = vmatmul.mubr.bf16.gmra.mrb[0].mxu0 %v843
        %v1045 = vpop.f32.mrb[0].mxu0
        %v1046 = vadd.f32 %v705, %v1045
        %v1047 = vpop.f32.mrb[0].mxu0
        %v1048 = vpop.f32.mrb[0].mxu0
        %v1049 = vadd.f32 %v705, %v1048
        %v1050 = vpop.f32.mrb[0].mxu0
        %1051 = vmatprep.mubr.bf16.mxu0 0
        %1052 = vmatmul.mubr.bf16.gmra.mrb[0].mxu0 %v844
        %v1053 = vpop.f32.mrb[0].mxu0
        %v1054 = vadd.f32 %v705, %v1053
        %v1055 = vpop.f32.mrb[0].mxu0
        %v1056 = vpop.f32.mrb[0].mxu0
        %v1057 = vadd.f32 %v705, %v1056
        %v1058 = vpop.f32.mrb[0].mxu0
        %1059 = vmatprep.mubr.bf16.mxu0 0
        %1060 = vmatmul.mubr.bf16.gmra.mrb[0].mxu0 %v845
        %v1061 = vpop.f32.mrb[0].mxu0
        %v1062 = vadd.f32 %v705, %v1061
        %v1063 = vpop.f32.mrb[0].mxu0
        %v1064 = vpop.f32.mrb[0].mxu0
        %v1065 = vadd.f32 %v705, %v1064
        %v1066 = vpop.f32.mrb[0].mxu0
        %1067 = vmatprep.mubr.bf16.mxu0 0
        %1068 = vmatmul.mubr.bf16.gmra.mrb[0].mxu0 %v846
        %v1069 = vpop.f32.mrb[0].mxu0
        %v1070 = vadd.f32 %v705, %v1069
        %v1071 = vpop.f32.mrb[0].mxu0
        %v1072 = vpop.f32.mrb[0].mxu0
        %v1073 = vadd.f32 %v705, %v1072
        %v1074 = vpop.f32.mrb[0].mxu0
        %1075 = vmatprep.mubr.bf16.mxu0 0
        %1076 = vmatmul.mubr.bf16.gmra.mrb[0].mxu0 %v847
        %v1077 = vpop.f32.mrb[0].mxu0
        %v1078 = vadd.f32 %v705, %v1077
        %v1079 = vpop.f32.mrb[0].mxu0
        %v1080 = vpop.f32.mrb[0].mxu0
        %v1081 = vadd.f32 %v705, %v1080
        %v1082 = vpop.f32.mrb[0].mxu0
        %1083 = vmatprep.mubr.bf16.mxu0 0
        %1084 = vmatmul.mubr.bf16.gmra.mrb[0].mxu0 %v848
        %v1085 = vpop.f32.mrb[0].mxu0
        %v1086 = vadd.f32 %v705, %v1085
        %v1087 = vpop.f32.mrb[0].mxu0
        %v1088 = vpop.f32.mrb[0].mxu0
        %v1089 = vadd.f32 %v705, %v1088
        %v1090 = vpop.f32.mrb[0].mxu0
        %1091 = vmatprep.mubr.bf16.mxu0 0
        %1092 = vmatmul.mubr.bf16.gmra.mrb[0].mxu0 %v849
        %v1093 = vpop.f32.mrb[0].mxu0
        %v1094 = vadd.f32 %v705, %v1093
        %v1095 = vpop.f32.mrb[0].mxu0
        %v1096 = vpop.f32.mrb[0].mxu0
        %v1097 = vadd.f32 %v705, %v1096
        %v1098 = vpop.f32.mrb[0].mxu0
        %1099 = vmatprep.mubr.bf16.mxu0 0
        %1100 = vmatmul.mubr.bf16.gmra.mrb[0].mxu0 %v850
        %v1101 = vpop.f32.mrb[0].mxu0
        %v1102 = vadd.f32 %v705, %v1101
        %v1103 = vpop.f32.mrb[0].mxu0
        %v1104 = vpop.f32.mrb[0].mxu0
        %v1105 = vadd.f32 %v705, %v1104
        %v1106 = vpop.f32.mrb[0].mxu0
        %1107 = vmatprep.mubr.bf16.mxu0 0
        %1108 = vmatmul.mubr.bf16.gmra.mrb[0].mxu0 %v851
        %v1109 = vpop.f32.mrb[0].mxu0
        %v1110 = vadd.f32 %v705, %v1109
        %v1111 = vpop.f32.mrb[0].mxu0
        %v1112 = vpop.f32.mrb[0].mxu0
        %v1113 = vadd.f32 %v705, %v1112
        %v1114 = vpop.f32.mrb[0].mxu0
        %1115 = vmatprep.mubr.bf16.mxu0 0
        %1116 = vmatmul.mubr.bf16.gmra.mrb[0].mxu0 %v852
        %v1117 = vpop.f32.mrb[0].mxu0
        %v1118 = vadd.f32 %v705, %v1117
        %v1119 = vpop.f32.mrb[0].mxu0
        %v1120 = vpop.f32.mrb[0].mxu0
        %v1121 = vadd.f32 %v705, %v1120
        %v1122 = vpop.f32.mrb[0].mxu0
        %1123 = vmatprep.mubr.bf16.mxu0 0
        %1124 = vmatmul.mubr.bf16.gmra.mrb[0].mxu0 %v853
        %v1125 = vpop.f32.mrb[0].mxu0
        %v1126 = vadd.f32 %v705, %v1125
        %v1127 = vpop.f32.mrb[0].mxu0
        %v1128 = vpop.f32.mrb[0].mxu0
        %v1129 = vadd.f32 %v705, %v1128
        %v1130 = vpop.f32.mrb[0].mxu0
        %1131 = vmatprep.mubr.bf16.mxu0 0
        %1132 = vmatmul.mubr.bf16.gmra.mrb[0].mxu0 %v854
        %v1133 = vpop.f32.mrb[0].mxu0
        %v1134 = vadd.f32 %v705, %v1133
        %v1135 = vpop.f32.mrb[0].mxu0
        %v1136 = vpop.f32.mrb[0].mxu0
        %v1137 = vadd.f32 %v705, %v1136
        %v1138 = vpop.f32.mrb[0].mxu0
        %1139 = vmatprep.mubr.bf16.mxu0 0
        %1140 = vmatmul.mubr.bf16.gmra.mrb[0].mxu0 %v855
        %v1141 = vpop.f32.mrb[0].mxu0
        %v1142 = vadd.f32 %v705, %v1141
        %v1143 = vpop.f32.mrb[0].mxu0
        %v1144 = vpop.f32.mrb[0].mxu0
        %v1145 = vadd.f32 %v705, %v1144
        %v1146 = vpop.f32.mrb[0].mxu0
        %1147 = vmatprep.mubr.bf16.mxu0 0
        %1148 = vmatmul.mubr.bf16.gmra.mrb[0].mxu0 %v856
        %v1149 = vpop.f32.mrb[0].mxu0
        %v1150 = vadd.f32 %v705, %v1149
        %v1151 = vpop.f32.mrb[0].mxu0
        %v1152 = vpop.f32.mrb[0].mxu0
        %v1153 = vadd.f32 %v705, %v1152
        %v1154 = vpop.f32.mrb[0].mxu0
        %1155 = vmatprep.mubr.bf16.mxu0 0
        %1156 = vmatmul.mubr.bf16.gmra.mrb[0].mxu0 %v857
        %v1157 = vpop.f32.mrb[0].mxu0
        %v1158 = vadd.f32 %v705, %v1157
        %v1159 = vpop.f32.mrb[0].mxu0
        %v1160 = vpop.f32.mrb[0].mxu0
        %v1161 = vadd.f32 %v705, %v1160
        %v1162 = vpop.f32.mrb[0].mxu0
        %1163 = vmatprep.mubr.bf16.mxu0 0
        %1164 = vmatmul.mubr.bf16.gmra.mrb[0].mxu0 %v858
        %v1165 = vpop.f32.mrb[0].mxu0
        %v1166 = vadd.f32 %v705, %v1165
        %v1167 = vpop.f32.mrb[0].mxu0
        %v1168 = vpop.f32.mrb[0].mxu0
        %v1169 = vadd.f32 %v705, %v1168
        %v1170 = vpop.f32.mrb[0].mxu0
        %1171 = vmatprep.mubr.bf16.mxu0 0
        %1172 = vmatmul.mubr.bf16.gmra.mrb[0].mxu0 %v859
        %v1173 = vpop.f32.mrb[0].mxu0
        %v1174 = vadd.f32 %v705, %v1173
        %v1175 = vpop.f32.mrb[0].mxu0
        %v1176 = vpop.f32.mrb[0].mxu0
        %v1177 = vadd.f32 %v705, %v1176
        %v1178 = vpop.f32.mrb[0].mxu0
        %1179 = vmatprep.mubr.bf16.mxu0 0
        %1180 = vmatmul.mubr.bf16.gmra.mrb[0].mxu0 %v860
        %v1181 = vpop.f32.mrb[0].mxu0
        %v1182 = vadd.f32 %v705, %v1181
        %v1183 = vpop.f32.mrb[0].mxu0
        %v1184 = vpop.f32.mrb[0].mxu0
        %v1185 = vadd.f32 %v705, %v1184
        %v1186 = vpop.f32.mrb[0].mxu0
        %1187 = vmatprep.mubr.bf16.mxu0 0
        %1188 = vmatmul.mubr.bf16.gmra.mrb[0].mxu0 %v861
        %v1189 = vpop.f32.mrb[0].mxu0
        %v1190 = vadd.f32 %v705, %v1189
        %v1191 = vpop.f32.mrb[0].mxu0
        %v1192 = vpop.f32.mrb[0].mxu0
        %v1193 = vadd.f32 %v705, %v1192
        %v1194 = vpop.f32.mrb[0].mxu0
        %1195 = vmatprep.mubr.bf16.mxu0 0
        %1196 = vmatmul.mubr.bf16.gmra.mrb[0].mxu0 %v862
        %v1197 = vpop.f32.mrb[0].mxu0
        %v1198 = vadd.f32 %v705, %v1197
        %v1199 = vpop.f32.mrb[0].mxu0
        %v1200 = vpop.f32.mrb[0].mxu0
        %v1201 = vadd.f32 %v705, %v1200
        %v1202 = vpop.f32.mrb[0].mxu0
        %1203 = vmatprep.mubr.bf16.mxu0 0
        %1204 = vmatmul.mubr.bf16.gmra.mrb[0].mxu0 %v863
        %v1205 = vpop.f32.mrb[0].mxu0
        %v1206 = vadd.f32 %v705, %v1205
        %v1207 = vpop.f32.mrb[0].mxu0
        %v1208 = vpop.f32.mrb[0].mxu0
        %v1209 = vadd.f32 %v705, %v1208
        %v1210 = vpop.f32.mrb[0].mxu0
        %1211 = vmatprep.mubr.bf16.mxu0 0
        %1212 = vmatmul.mubr.bf16.gmra.mrb[0].mxu0 %v864
        %v1213 = vpop.f32.mrb[0].mxu0
        %v1214 = vadd.f32 %v705, %v1213
        %v1215 = vpop.f32.mrb[0].mxu0
        %v1216 = vpop.f32.mrb[0].mxu0
        %v1217 = vadd.f32 %v705, %v1216
        %v1218 = vpop.f32.mrb[0].mxu0
        %1219 = vmatprep.mubr.bf16.mxu0 0
        %1220 = vmatmul.mubr.bf16.gmra.mrb[0].mxu0 %v865
        %v1221 = vpop.f32.mrb[0].mxu0
        %v1222 = vadd.f32 %v705, %v1221
        %v1223 = vpop.f32.mrb[0].mxu0
        %v1224 = vpop.f32.mrb[0].mxu0
        %v1225 = vadd.f32 %v705, %v1224
        %v1226 = vpop.f32.mrb[0].mxu0
        %1227 = vmatprep.mubr.bf16.mxu0 0
        %1228 = vmatmul.mubr.bf16.gmra.mrb[0].mxu0 %v866
        %v1229 = vpop.f32.mrb[0].mxu0
        %v1230 = vadd.f32 %v705, %v1229
        %v1231 = vpop.f32.mrb[0].mxu0
        %v1232 = vpop.f32.mrb[0].mxu0
        %v1233 = vadd.f32 %v705, %v1232
        %v1234 = vpop.f32.mrb[0].mxu0
        %1235 = vdwg.mxu0
        %v1236 = vmax.f32 %v982, 0.0
        %v1237 = vmax.f32 %v985, 0.0
        %v1238 = vmax.f32 %v990, 0.0
        %v1239 = vmax.f32 %v993, 0.0
        %v1240 = vmax.f32 %v998, 0.0
        %v1241 = vmax.f32 %v1001, 0.0
        %v1242 = vmax.f32 %v1006, 0.0
        %v1243 = vmax.f32 %v1009, 0.0
        %v1244 = vmax.f32 %v1014, 0.0
        %v1245 = vmax.f32 %v1017, 0.0
        %v1246 = vmax.f32 %v1022, 0.0
        %v1247 = vmax.f32 %v1025, 0.0
        %v1248 = vmax.f32 %v1030, 0.0
        %v1249 = vmax.f32 %v1033, 0.0
        %v1250 = vmax.f32 %v1038, 0.0
        %v1251 = vmax.f32 %v1041, 0.0
        %v1252 = vmax.f32 %v1046, 0.0
        %v1253 = vmax.f32 %v1049, 0.0
        %v1254 = vmax.f32 %v1054, 0.0
        %v1255 = vmax.f32 %v1057, 0.0
        %v1256 = vmax.f32 %v1062, 0.0
        %v1257 = vmax.f32 %v1065, 0.0
        %v1258 = vmax.f32 %v1070, 0.0
        %v1259 = vmax.f32 %v1073, 0.0
        %v1260 = vmax.f32 %v1078, 0.0
        %v1261 = vmax.f32 %v1081, 0.0
        %v1262 = vmax.f32 %v1086, 0.0
        %v1263 = vmax.f32 %v1089, 0.0
        %v1264 = vmax.f32 %v1094, 0.0
        %v1265 = vmax.f32 %v1097, 0.0
        %v1266 = vmax.f32 %v1102, 0.0
        %v1267 = vmax.f32 %v1105, 0.0
        %v1268 = vmax.f32 %v1110, 0.0
        %v1269 = vmax.f32 %v1113, 0.0
        %v1270 = vmax.f32 %v1118, 0.0
        %v1271 = vmax.f32 %v1121, 0.0
        %v1272 = vmax.f32 %v1126, 0.0
        %v1273 = vmax.f32 %v1129, 0.0
        %v1274 = vmax.f32 %v1134, 0.0
        %v1275 = vmax.f32 %v1137, 0.0
        %v1276 = vmax.f32 %v1142, 0.0
        %v1277 = vmax.f32 %v1145, 0.0
        %v1278 = vmax.f32 %v1150, 0.0
        %v1279 = vmax.f32 %v1153, 0.0
        %v1280 = vmax.f32 %v1158, 0.0
        %v1281 = vmax.f32 %v1161, 0.0
        %v1282 = vmax.f32 %v1166, 0.0
        %v1283 = vmax.f32 %v1169, 0.0
        %v1284 = vmax.f32 %v1174, 0.0
        %v1285 = vmax.f32 %v1177, 0.0
        %v1286 = vmax.f32 %v1182, 0.0
        %v1287 = vmax.f32 %v1185, 0.0
        %v1288 = vmax.f32 %v1190, 0.0
        %v1289 = vmax.f32 %v1193, 0.0
        %v1290 = vmax.f32 %v1198, 0.0
        %v1291 = vmax.f32 %v1201, 0.0
        %v1292 = vmax.f32 %v1206, 0.0
        %v1293 = vmax.f32 %v1209, 0.0
        %v1294 = vmax.f32 %v1214, 0.0
        %v1295 = vmax.f32 %v1217, 0.0
        %v1296 = vmax.f32 %v1222, 0.0
        %v1297 = vmax.f32 %v1225, 0.0
        %v1298 = vmax.f32 %v1230, 0.0
        %v1299 = vmax.f32 %v1233, 0.0
        %v1300 = vld [vmem:[#allocation2] sm:$0xff]
        %v1301 = vadd.f32 %v1236, %v1237
        %v1302 = vadd.f32 %v1301, %v1238
        %v1303 = vadd.f32 %v1302, %v1239
        %v1304 = vadd.f32 %v1303, %v1240
        %v1305 = vadd.f32 %v1304, %v1241
        %v1306 = vadd.f32 %v1305, %v1242
        %v1307 = vadd.f32 %v1306, %v1243
        %v1308 = vrot.slane %v1307, 4
        %v1309 = vadd.f32 %v1307, %v1308
        %v1310 = vrot.slane %v1309, 2
        %v1311 = vadd.f32 %v1309, %v1310
        %v1312 = vrot.slane %v1311, 1
        %v1313 = vadd.f32 %v1311, %v1312
        %v1314 = vadd.f32 %v1244, %v1245
        %v1315 = vadd.f32 %v1314, %v1246
        %v1316 = vadd.f32 %v1315, %v1247
        %v1317 = vadd.f32 %v1316, %v1248
        %v1318 = vadd.f32 %v1317, %v1249
        %v1319 = vadd.f32 %v1318, %v1250
        %v1320 = vadd.f32 %v1319, %v1251
        %v1321 = vrot.slane %v1320, 4
        %v1322 = vadd.f32 %v1320, %v1321
        %v1323 = vrot.slane %v1322, 2
        %v1324 = vadd.f32 %v1322, %v1323
        %v1325 = vrot.slane %v1324, 1
        %v1326 = vadd.f32 %v1324, %v1325
        %v1327 = vadd.f32 %v1252, %v1253
        %v1328 = vadd.f32 %v1327, %v1254
        %v1329 = vadd.f32 %v1328, %v1255
        %v1330 = vadd.f32 %v1329, %v1256
        %v1331 = vadd.f32 %v1330, %v1257
        %v1332 = vadd.f32 %v1331, %v1258
        %v1333 = vadd.f32 %v1332, %v1259
        %v1334 = vrot.slane %v1333, 4
        %v1335 = vadd.f32 %v1333, %v1334
        %v1336 = vrot.slane %v1335, 2
        %v1337 = vadd.f32 %v1335, %v1336
        %v1338 = vrot.slane %v1337, 1
        %v1339 = vadd.f32 %v1337, %v1338
        %v1340 = vadd.f32 %v1260, %v1261
        %v1341 = vadd.f32 %v1340, %v1262
        %v1342 = vadd.f32 %v1341, %v1263
        %v1343 = vadd.f32 %v1342, %v1264
        %v1344 = vadd.f32 %v1343, %v1265
        %v1345 = vadd.f32 %v1344, %v1266
        %v1346 = vadd.f32 %v1345, %v1267
        %v1347 = vrot.slane %v1346, 4
        %v1348 = vadd.f32 %v1346, %v1347
        %v1349 = vrot.slane %v1348, 2
        %v1350 = vadd.f32 %v1348, %v1349
        %v1351 = vrot.slane %v1350, 1
        %v1352 = vadd.f32 %v1350, %v1351
        %v1353 = vadd.f32 %v1268, %v1269
        %v1354 = vadd.f32 %v1353, %v1270
        %v1355 = vadd.f32 %v1354, %v1271
        %v1356 = vadd.f32 %v1355, %v1272
        %v1357 = vadd.f32 %v1356, %v1273
        %v1358 = vadd.f32 %v1357, %v1274
        %v1359 = vadd.f32 %v1358, %v1275
        %v1360 = vrot.slane %v1359, 4
        %v1361 = vadd.f32 %v1359, %v1360
        %v1362 = vrot.slane %v1361, 2
        %v1363 = vadd.f32 %v1361, %v1362
        %v1364 = vrot.slane %v1363, 1
        %v1365 = vadd.f32 %v1363, %v1364
        %v1366 = vadd.f32 %v1276, %v1277
        %v1367 = vadd.f32 %v1366, %v1278
        %v1368 = vadd.f32 %v1367, %v1279
        %v1369 = vadd.f32 %v1368, %v1280
        %v1370 = vadd.f32 %v1369, %v1281
        %v1371 = vadd.f32 %v1370, %v1282
        %v1372 = vadd.f32 %v1371, %v1283
        %v1373 = vrot.slane %v1372, 4
        %v1374 = vadd.f32 %v1372, %v1373
        %v1375 = vrot.slane %v1374, 2
        %v1376 = vadd.f32 %v1374, %v1375
        %v1377 = vrot.slane %v1376, 1
        %v1378 = vadd.f32 %v1376, %v1377
        %v1379 = vadd.f32 %v1284, %v1285
        %v1380 = vadd.f32 %v1379, %v1286
        %v1381 = vadd.f32 %v1380, %v1287
        %v1382 = vadd.f32 %v1381, %v1288
        %v1383 = vadd.f32 %v1382, %v1289
        %v1384 = vadd.f32 %v1383, %v1290
        %v1385 = vadd.f32 %v1384, %v1291
        %v1386 = vrot.slane %v1385, 4
        %v1387 = vadd.f32 %v1385, %v1386
        %v1388 = vrot.slane %v1387, 2
        %v1389 = vadd.f32 %v1387, %v1388
        %v1390 = vrot.slane %v1389, 1
        %v1391 = vadd.f32 %v1389, %v1390
        %v1392 = vadd.f32 %v1292, %v1293
        %v1393 = vadd.f32 %v1392, %v1294
        %v1394 = vadd.f32 %v1393, %v1295
        %v1395 = vadd.f32 %v1394, %v1296
        %v1396 = vadd.f32 %v1395, %v1297
        %v1397 = vadd.f32 %v1396, %v1298
        %v1398 = vadd.f32 %v1397, %v1299
        %v1399 = vrot.slane %v1398, 4
        %v1400 = vadd.f32 %v1398, %v1399
        %v1401 = vrot.slane %v1400, 2
        %v1402 = vadd.f32 %v1400, %v1401
        %v1403 = vrot.slane %v1402, 1
        %v1404 = vadd.f32 %v1402, %v1403
        %vm1413 = vcmask 1041409
        %v1414 = vsel %vm1413, %v1326, %v1313
        %vm1415 = vcmask 1042434
        %v1416 = vsel %vm1415, %v1339, %v1414
        %vm1417 = vcmask 1043459
        %v1418 = vsel %vm1417, %v1352, %v1416
        %vm1419 = vcmask 1044484
        %v1420 = vsel %vm1419, %v1365, %v1418
        %vm1421 = vcmask 1045509
        %v1422 = vsel %vm1421, %v1378, %v1420
        %vm1423 = vcmask 1046534
        %v1424 = vsel %vm1423, %v1391, %v1422
        %vm1425 = vcmask 1047559
        %v1426 = vsel %vm1425, %v1404, %v1424
        %v1428 = vadd.f32 %v1300, %v1426
        %1429 = vst [vmem:[#allocation2] sm:$0xff] %v1428
        %p1430 = scmp.eq.s32.totalorder %s21, 3
        // Predicated region
        $region102: #{galaxy_model.1} parent=92 // pred_check
          %p1431 = pneg %p1430
        $region103: #{galaxy_model.1} parent=92 // pred_check_branch
          %1433 = sbr.rel (%p1431) target = $region105
        $region104: #{galaxy_model.1} parent=92 // pred_region
          %v1434 = vld [vmem:[#allocation2] sm:$0xff]
          %v1435 = vmul.f32 %v1434, 0.00390625
          %v1436 = vpack.c.bf16 %v1435, %v1435
          %v1437 = vld [vmem:[%s3] sm:$0xf]
          %v1438 = vld [vmem:[%s3 + $0x4] sm:$0xf]
          %v1439 = vld [vmem:[%s3 + $0x8] sm:$0xf]
          %v1440 = vld [vmem:[%s3 + $0xc] sm:$0xf]
          %v1441 = vld [vmem:[%s3 + $0x10] sm:$0xf]
          %v1442 = vld [vmem:[%s3 + $0x14] sm:$0xf]
          %v1443 = vld [vmem:[%s3 + $0x18] sm:$0xf]
          %v1444 = vld [vmem:[%s3 + $0x1c] sm:$0xf]
          %v1445 = vld [vmem:[%s3 + $0x20] sm:$0xf]
          %v1446 = vld [vmem:[%s3 + $0x24] sm:$0xf]
          %v1447 = vld [vmem:[%s3 + $0x28] sm:$0xf]
          %v1448 = vld [vmem:[%s3 + $0x2c] sm:$0xf]
          %v1449 = vld [vmem:[%s3 + $0x30] sm:$0xf]
          %v1450 = vld [vmem:[%s3 + $0x34] sm:$0xf]
          %v1451 = vld [vmem:[%s3 + $0x38] sm:$0xf]
          %v1452 = vld [vmem:[%s3 + $0x3c] sm:$0xf]
          %v1453 = vld [vmem:[%s4] sm:$0x1]
          %v1455 = vlaneseq
          %v1456 = vshrl.u32 %v1455, 7
          %v1457 = vsub.s32 0, %v1456
          %v1458 = vrot.slane %v1453, %v1457
          %v1476 = vunpack.c.l.b16 %v1437
          %v1477 = vunpack.c.l.b16 %v1438
          %v1478 = vunpack.c.l.b16 %v1439
          %v1479 = vunpack.c.l.b16 %v1440
          %v1480 = vunpack.c.l.b16 %v1441
          %v1481 = vunpack.c.l.b16 %v1442
          %v1482 = vunpack.c.l.b16 %v1443
          %v1483 = vunpack.c.l.b16 %v1444
          %v1484 = vunpack.c.l.b16 %v1445
          %v1485 = vunpack.c.l.b16 %v1446
          %v1486 = vunpack.c.l.b16 %v1447
          %v1487 = vunpack.c.l.b16 %v1448
          %v1488 = vunpack.c.l.b16 %v1449
          %v1489 = vunpack.c.l.b16 %v1450
          %v1490 = vunpack.c.l.b16 %v1451
          %v1491 = vunpack.c.l.b16 %v1452
          %v1492 = vpack.c.b16 %v1477, %v1476
          %v1493 = vpack.c.b16 %v1479, %v1478
          %v1494 = vpack.c.b16 %v1481, %v1480
          %v1495 = vpack.c.b16 %v1483, %v1482
          %v1496 = vpack.c.b16 %v1485, %v1484
          %v1497 = vpack.c.b16 %v1487, %v1486
          %v1498 = vpack.c.b16 %v1489, %v1488
          %v1499 = vpack.c.b16 %v1491, %v1490
          %1508 = vmatprep.subr.bf16.mxu0 0
          %1509 = vmatpush1.bf16.msra.mxu0 %v1492
          %1510 = vmatprep.subr.bf16.mxu0 0
          %1511 = vmatpush1.bf16.msra.mxu0 %v1493
          %1512 = vmatprep.subr.bf16.mxu0 0
          %1513 = vmatpush1.bf16.msra.mxu0 %v1494
          %1514 = vmatprep.subr.bf16.mxu0 0
          %1515 = vmatpush1.bf16.msra.mxu0 %v1495
          %1516 = vmatprep.subr.bf16.mxu0 0
          %1517 = vmatpush1.bf16.msra.mxu0 %v1496
          %1518 = vmatprep.subr.bf16.mxu0 0
          %1519 = vmatpush1.bf16.msra.mxu0 %v1497
          %1520 = vmatprep.subr.bf16.mxu0 0
          %1521 = vmatpush1.bf16.msra.mxu0 %v1498
          %1522 = vmatprep.subr.bf16.mxu0 0
          %1523 = vmatpush1.bf16.msra.mxu0 %v1499
          %1524 = vmatprep.subr.bf16.mxu0 0
          %1525 = vmatpush1.bf16.msra.mxu0 0
          %1526 = vmatprep.subr.bf16.mxu0 0
          %1527 = vmatpush1.bf16.msra.mxu0 0
          %1528 = vmatprep.subr.bf16.mxu0 0
          %1529 = vmatpush1.bf16.msra.mxu0 0
          %1530 = vmatprep.subr.bf16.mxu0 0
          %1531 = vmatpush1.bf16.msra.mxu0 0
          %1532 = vmatprep.subr.bf16.mxu0 0
          %1533 = vmatpush1.bf16.msra.mxu0 0
          %1534 = vmatprep.subr.bf16.mxu0 0
          %1535 = vmatpush1.bf16.msra.mxu0 0
          %1536 = vmatprep.subr.bf16.mxu0 0
          %1537 = vmatpush1.bf16.msra.mxu0 0
          %1538 = vmatprep.subr.bf16.mxu0 0
          %1539 = vmatpush1.bf16.msra.mxu0 0
          %1540 = vmatprep.mubr.bf16.mxu0 0
          %1541 = vmatmul.mubr.bf16.gmra.mrb[0].mxu0 %v1436
          %v1542 = vpop.f32.mrb[0].mxu0
          %v1543 = vadd.f32 %v1458, %v1542
          %v1544 = vpop.f32.mrb[0].mxu0
          %v1545 = vpop.f32.mrb[0].mxu0
          %v1546 = vpop.f32.mrb[0].mxu0
          %1547 = vdwg.mxu0
          %v1548 = vrot.slane %v1543, 4
          %v1549 = vadd.f32 %v1543, %v1548
          %v1550 = vrot.slane %v1549, 2
          %v1551 = vadd.f32 %v1549, %v1550
          %v1552 = vrot.slane %v1551, 1
          %v1553 = vadd.f32 %v1551, %v1552
          %v1554 = vrcp.pop 8.0
          %v1555 = vmul.f32 %v1553, %v1554
          %v1556 = vsub.f32 %v1543, %v1555
          %v1557 = vmul.f32 %v1556, %v1556
          %v1558 = vrot.slane %v1557, 4
          %v1559 = vadd.f32 %v1557, %v1558
          %v1560 = vrot.slane %v1559, 2
          %v1561 = vadd.f32 %v1559, %v1560
          %v1562 = vrot.slane %v1561, 1
          %v1563 = vadd.f32 %v1561, %v1562
          %v1564 = vmul.f32 %v1563, %v1554
          %v1565 = vadd.f32 %v1564, 1e-05
          %v1566 = vrsqrt.pop %v1565
          %v1567 = vmul.f32 %v1556, %v1566
          %v1568 = vld [vmem:[%s5] sm:$0x1]
          %v1570 = vlaneseq
          %v1571 = vshrl.u32 %v1570, 7
          %v1572 = vsub.s32 0, %v1571
          %v1573 = vrot.slane %v1568, %v1572
          %v1575 = vmul.f32 %v1567, %v1573
          %v1576 = vld [vmem:[%s6] sm:$0x1]
          %v1578 = vlaneseq
          %v1579 = vshrl.u32 %v1578, 7
          %v1580 = vsub.s32 0, %v1579
          %v1581 = vrot.slane %v1576, %v1580
          %v1583 = vadd.f32 %v1575, %v1581
          %v1584 = vmax.f32 %v1583, 0.0
          %v1585 = vpack.c.bf16 %v1584, %v1584
          %v1586 = vld [vmem:[%s7] sm:$0xf]
          %v1587 = vld [vmem:[%s7 + $0x4] sm:$0xf]
          %v1588 = vld [vmem:[%s7 + $0x8] sm:$0xf]
          %v1589 = vld [vmem:[%s7 + $0xc] sm:$0xf]
          %v1590 = vld [vmem:[%s7 + $0x10] sm:$0xf]
          %v1591 = vld [vmem:[%s7 + $0x14] sm:$0xf]
          %v1592 = vld [vmem:[%s7 + $0x18] sm:$0xf]
          %v1593 = vld [vmem:[%s7 + $0x1c] sm:$0xf]
          %v1594 = vld [vmem:[%s7 + $0x20] sm:$0xf]
          %v1595 = vld [vmem:[%s7 + $0x24] sm:$0xf]
          %v1596 = vld [vmem:[%s7 + $0x28] sm:$0xf]
          %v1597 = vld [vmem:[%s7 + $0x2c] sm:$0xf]
          %v1598 = vld [vmem:[%s7 + $0x30] sm:$0xf]
          %v1599 = vld [vmem:[%s7 + $0x34] sm:$0xf]
          %v1600 = vld [vmem:[%s7 + $0x38] sm:$0xf]
          %v1601 = vld [vmem:[%s7 + $0x3c] sm:$0xf]
          %v1602 = vld [vmem:[%s8] sm:$0x1]
          %v1604 = vlaneseq
          %v1605 = vshrl.u32 %v1604, 7
          %v1606 = vsub.s32 0, %v1605
          %v1607 = vrot.slane %v1602, %v1606
          %v1625 = vunpack.c.l.b16 %v1586
          %v1626 = vunpack.c.l.b16 %v1587
          %v1627 = vunpack.c.l.b16 %v1588
          %v1628 = vunpack.c.l.b16 %v1589
          %v1629 = vunpack.c.l.b16 %v1590
          %v1630 = vunpack.c.l.b16 %v1591
          %v1631 = vunpack.c.l.b16 %v1592
          %v1632 = vunpack.c.l.b16 %v1593
          %v1633 = vunpack.c.l.b16 %v1594
          %v1634 = vunpack.c.l.b16 %v1595
          %v1635 = vunpack.c.l.b16 %v1596
          %v1636 = vunpack.c.l.b16 %v1597
          %v1637 = vunpack.c.l.b16 %v1598
          %v1638 = vunpack.c.l.b16 %v1599
          %v1639 = vunpack.c.l.b16 %v1600
          %v1640 = vunpack.c.l.b16 %v1601
          %v1641 = vpack.c.b16 %v1626, %v1625
          %v1642 = vpack.c.b16 %v1628, %v1627
          %v1643 = vpack.c.b16 %v1630, %v1629
          %v1644 = vpack.c.b16 %v1632, %v1631
          %v1645 = vpack.c.b16 %v1634, %v1633
          %v1646 = vpack.c.b16 %v1636, %v1635
          %v1647 = vpack.c.b16 %v1638, %v1637
          %v1648 = vpack.c.b16 %v1640, %v1639
          %1657 = vmatprep.subr.bf16.mxu0 0
          %1658 = vmatpush1.bf16.msra.mxu0 %v1641
          %1659 = vmatprep.subr.bf16.mxu0 0
          %1660 = vmatpush1.bf16.msra.mxu0 %v1642
          %1661 = vmatprep.subr.bf16.mxu0 0
          %1662 = vmatpush1.bf16.msra.mxu0 %v1643
          %1663 = vmatprep.subr.bf16.mxu0 0
          %1664 = vmatpush1.bf16.msra.mxu0 %v1644
          %1665 = vmatprep.subr.bf16.mxu0 0
          %1666 = vmatpush1.bf16.msra.mxu0 %v1645
          %1667 = vmatprep.subr.bf16.mxu0 0
          %1668 = vmatpush1.bf16.msra.mxu0 %v1646
          %1669 = vmatprep.subr.bf16.mxu0 0
          %1670 = vmatpush1.bf16.msra.mxu0 %v1647
          %1671 = vmatprep.subr.bf16.mxu0 0
          %1672 = vmatpush1.bf16.msra.mxu0 %v1648
          %1673 = vmatprep.subr.bf16.mxu0 0
          %1674 = vmatpush1.bf16.msra.mxu0 0
          %1675 = vmatprep.subr.bf16.mxu0 0
          %1676 = vmatpush1.bf16.msra.mxu0 0
          %1677 = vmatprep.subr.bf16.mxu0 0
          %1678 = vmatpush1.bf16.msra.mxu0 0
          %1679 = vmatprep.subr.bf16.mxu0 0
          %1680 = vmatpush1.bf16.msra.mxu0 0
          %1681 = vmatprep.subr.bf16.mxu0 0
          %1682 = vmatpush1.bf16.msra.mxu0 0
          %1683 = vmatprep.subr.bf16.mxu0 0
          %1684 = vmatpush1.bf16.msra.mxu0 0
          %1685 = vmatprep.subr.bf16.mxu0 0
          %1686 = vmatpush1.bf16.msra.mxu0 0
          %1687 = vmatprep.subr.bf16.mxu0 0
          %1688 = vmatpush1.bf16.msra.mxu0 0
          %1689 = vmatprep.mubr.bf16.mxu0 0
          %1690 = vmatmul.mubr.bf16.gmra.mrb[0].mxu0 %v1585
          %v1691 = vpop.f32.mrb[0].mxu0
          %v1692 = vadd.f32 %v1607, %v1691
          %v1693 = vpop.f32.mrb[0].mxu0
          %v1694 = vpop.f32.mrb[0].mxu0
          %v1695 = vpop.f32.mrb[0].mxu0
          %1696 = vdwg.mxu0
          %v1697 = vmul.f32 %v1692, %v1692
          %1698 = vadd.xlane.f32.xlu0 %v1697
          %v1699 = vpop.xlane.xlu0 %1698
          %v1700 = vmax.f32 %v1699, 1e-24
          %v1701 = vrsqrt.pop %v1700
          %v1702 = vmul.f32 %v1692, %v1701
          %1703 = vst [vmem:[#allocation4] sm:$0xff] %v1702
        $region105: #{galaxy_model.1} parent=92 // pred_fallthru
          _
        // Predicated region
        $region106: #{galaxy_model.1} parent=92 // pred_check
          %p1704 = pneg %p228
        $region107: #{galaxy_model.1} parent=92 // pred_check_branch
          %1706 = sbr.rel (%p1704) target = $region109
        $region108: #{galaxy_model.1} parent=92 // pred_region
          %s1708 = ssub.s32 128, 128
          %1709 = vsyncadd [#allocation5], %s1708
          %s1711 = sshll.u32 [#allocation4], 4
          %s1712 = int_to_ptr.vmem [resolvable:$true] %s1711
          %1714 = dma.vmem_to_hbm [thread:$0]  %s1712, 128, %s9, [#allocation5]
        $region109: #{galaxy_model.1} parent=92 // pred_fallthru
          _
        // Predicated region
        $region110: #{galaxy_model.1} parent=92 // pred_check
          %p1715 = pneg %p228
        $region111: #{galaxy_model.1} parent=92 // pred_check_branch
          %1717 = sbr.rel (%p1715) target = $region113
        $region112: #{galaxy_model.1} parent=92 // pred_region
          %1718 = dma.done [#allocation5], 128
        $region113: #{galaxy_model.1} parent=92 // pred_fallthru
          _
      $region93: #{galaxy_model.1} parent=5 // pred_fallthru
        _
      %p1719 = scmp.le.s32.totalorder 2, %s16
      // Predicated region
      $region114: #{galaxy_model.1} parent=5 // pred_check
        %p1720 = pneg %p1719
      $region115: #{galaxy_model.1} parent=5 // pred_check_branch
        %1722 = sbr.rel (%p1720) target = $region117
      $region116: #{galaxy_model.1} parent=5 // pred_region
        %s1723 = ssub.s32 %s16, 2
      $region117: #{galaxy_model.1} parent=5 // pred_fallthru
        _
    $region6: #{galaxy_model.1} parent=1 // loop_footer
      %s20 = sadd.s32 1, %s16
    $region7: #{galaxy_model.1} parent=1 // loop_footer_branch
      %15 = sbr.rel target = $region3
    $region8: #{galaxy_model.1} parent=1 // loop_exit
      _
    %1724 = vsyncpa [#allocation5], 1
    %s1725 = scalar_lea.sflag [#allocation5], 1
    %1726 = vsyncpa %s1725, 1

</llo_original>
